<compile_context>
chip_gen: v7x
topology: tpu7x:2x2x1
jax: 0.10.0
libtpu: 0.0.40
codegen_flags: <defaults>
</compile_context>

<pallas_src>
import functools
import math

import jax
import jax.numpy as jnp
from jax.experimental import pallas as pl
from jax.experimental.pallas import tpu as pltpu


def _round_up(x: int, m: int) -> int:
    return ((x + m - 1) // m) * m


def _lcm(a: int, b: int) -> int:
    return a * b // math.gcd(a, b)


def _chip_info():
    """Best-effort (physical VMEM bytes per TensorCore, TensorCores per chip)."""
    phys, cores = 128 << 20, 1                       # v5e / v6e defaults
    try:
        kind = jax.devices()[0].device_kind.lower()
    except Exception:
        kind = ""
    if "v7" in kind or "7x" in kind:                 # v7x: 64 MiB/core, 2 cores
        phys, cores = 64 << 20, 2
    try:
        phys = min(phys, int(pltpu.get_tpu_info().vmem_capacity_bytes))
    except Exception:
        pass
    return phys, cores


# ---------------------------------------------------------------------------
# Path A kernel: fused GCNConv stack.
#   grid = (num_layers, num_row_tiles)    (both sequential; XW carried in VMEM)
#   a_ref   : (tm, n_pad)        bf16 row tile of A_hat
#   w_ref   : (1, c_pad, c_pad)  f32 W_{l+1}  (dummy for the last layer)
#   b_ref   : (1, 1, c_pad)      f32 b_l
#   xw0_ref : (n_pad, c_pad)     bf16 X @ W0 in HBM (memory_space=ANY)
#   o_ref   : (tm, c_pad)        f32 output tile (written only at last layer)
#   xw_a/b  : (n_pad, c_pad)     bf16 ping-pong scratches (current / next XW)
#   sem     : DMA semaphore for the one-time XW0 seed copy
# ---------------------------------------------------------------------------
def _fused_gcn_kernel(a_ref, w_ref, b_ref, xw0_ref, o_ref,
                      xw_a, xw_b, sem, *, tm, num_layers):
    layer = pl.program_id(0)
    tile = pl.program_id(1)

    # Seed layer 0's transformed features (computed outside the kernel) once.
    @pl.when((layer == 0) & (tile == 0))
    def _():
        cp = pltpu.make_async_copy(xw0_ref, xw_a, sem)
        cp.start()
        cp.wait()

    def step(cur_xw, nxt_xw):
        # Aggregate this row tile: bf16 x bf16 MXU matmul, f32 accumulation.
        agg = jnp.dot(a_ref[...], cur_xw[...],
                      preferred_element_type=jnp.float32)
        act = jnp.maximum(agg + b_ref[0], 0.0)            # bias + ReLU (f32)

        # Incrementally build the NEXT layer's XW from this tile's rows
        # (removes the per-layer tile-0 XW pipeline bubble).
        @pl.when(layer < num_layers - 1)
        def _():
            row0 = pl.multiple_of(tile * tm, tm)
            nxt = jnp.dot(act, w_ref[0], preferred_element_type=jnp.float32)
            nxt_xw[pl.ds(row0, tm), :] = nxt.astype(nxt_xw.dtype)

        # Only the last layer writes the kernel output (lane-dense c_pad).
        @pl.when(layer == num_layers - 1)
        def _():
            o_ref[...] = act.astype(o_ref.dtype)

    # Ping-pong the XW scratches by layer parity.
    @pl.when(layer % 2 == 0)
    def _():
        step(xw_a, xw_b)

    @pl.when(layer % 2 == 1)
    def _():
        step(xw_b, xw_a)


# ---------------------------------------------------------------------------
# Path B kernel: one GCNConv layer, aggregation tiled over (row, K).
#   Row axis is "parallel" (no cross-tile state) -> both cores on v7x.
# ---------------------------------------------------------------------------
def _gcn_layer_kernel(a_ref, xw_ref, b_ref, o_ref, acc_ref):
    k = pl.program_id(1)

    @pl.when(k == 0)
    def _():
        acc_ref[...] = jnp.zeros_like(acc_ref)

    acc_ref[...] += jnp.dot(a_ref[...], xw_ref[...],
                            preferred_element_type=jnp.float32)

    @pl.when(k == pl.num_programs(1) - 1)
    def _():
        o_ref[...] = jnp.maximum(acc_ref[...] + b_ref[...], 0.0)


# ---------------------------------------------------------------------------
# Plain-JAX glue: dense symmetric-normalized adjacency from edge_index
# (matches GCNConv with add_self_loops=True, normalize=True).
# ---------------------------------------------------------------------------
def normalized_adjacency(edge_index, num_nodes):
    src = edge_index[0]
    dst = edge_index[1]
    a = jnp.zeros((num_nodes, num_nodes), jnp.float32).at[dst, src].add(1.0)
    a = a + jnp.eye(num_nodes, dtype=jnp.float32)
    deg = a.sum(axis=1)
    d_inv_sqrt = jnp.where(deg > 0, 1.0 / jnp.sqrt(deg), 0.0)
    return d_inv_sqrt[:, None] * a * d_inv_sqrt[None, :]


# ---------------------------------------------------------------------------
# Path A wrapper
# ---------------------------------------------------------------------------
def _gcn_forward_fused(x, a_hat, params, *, c_pad, tm, n_pad, phys_vmem):
    n = x.shape[0]
    num_layers = len(params)
    out_channels = params[-1][0].shape[1]
    a_dtype = a_hat.dtype
    a_item = jnp.dtype(a_dtype).itemsize
    n_tiles = n_pad // tm
    a_resident = (n_tiles == 1)

    a_pad = jnp.zeros((n_pad, n_pad), a_dtype).at[:n, :n].set(a_hat)

    # Layer 0's transform outside the kernel (no in_channels inflation).
    w0, _ = params[0]
    xw0 = jnp.dot(x, w0)
    xw0_pad = jnp.zeros((n_pad, c_pad), jnp.bfloat16)
    xw0_pad = xw0_pad.at[:n, :w0.shape[1]].set(xw0.astype(jnp.bfloat16))

    # Kernel weight stack: entry l holds W_{l+1} (last entry is an unused dummy).
    w_stack = jnp.zeros((num_layers, c_pad, c_pad), jnp.float32)
    for l in range(num_layers - 1):
        w = params[l + 1][0]
        w_stack = w_stack.at[l, :w.shape[0], :w.shape[1]].set(w)
    b_stack = jnp.zeros((num_layers, 1, c_pad), jnp.float32)
    for l, (_, b) in enumerate(params):
        b_stack = b_stack.at[l, 0, :b.shape[0]].set(b)

    def vmem_need(a_buffers):
        return int(a_buffers * tm * n_pad * a_item      # A tile buffer(s)
                   + 2 * n_pad * c_pad * 2              # two bf16 XW scratches
                   + 2 * c_pad * c_pad * 4              # W block (double buffered)
                   + 2 * c_pad * 4                      # bias block
                   + 2 * tm * c_pad * 4)                # out tile (double buffered)

    cost = pl.CostEstimate(
        flops=int(num_layers * 2 * n_pad * n_pad * c_pad
                  + max(num_layers - 1, 0) * 2 * n_pad * c_pad * c_pad),
        transcendentals=0,
        bytes_accessed=int((1 if a_resident else num_layers) * n_pad * n_pad * a_item
                           + n_pad * c_pad * 2
                           + num_layers * (c_pad * c_pad + c_pad) * 4
                           + n_pad * c_pad * 4),
    )

    def call(single_buffer_a):
        if single_buffer_a:
            a_spec = pl.BlockSpec((tm, n_pad), lambda l, i: (i, 0),
                                  pipeline_mode=pl.Buffered(1))
        else:
            a_spec = pl.BlockSpec((tm, n_pad), lambda l, i: (i, 0))
        vmem_limit = int(min(max(vmem_need(1 if single_buffer_a else 2) + (8 << 20),
                                 32 << 20),
                             phys_vmem - (8 << 20)))
        return pl.pallas_call(
            functools.partial(_fused_gcn_kernel, tm=tm, num_layers=num_layers),
            out_shape=jax.ShapeDtypeStruct((n_pad, c_pad), jnp.float32),
            grid_spec=pltpu.PrefetchScalarGridSpec(
                num_scalar_prefetch=0,
                grid=(num_layers, n_tiles),
                in_specs=[
                    a_spec,                                               # A_hat
                    pl.BlockSpec((1, c_pad, c_pad), lambda l, i: (l, 0, 0)),  # W_{l+1}
                    pl.BlockSpec((1, 1, c_pad), lambda l, i: (l, 0, 0)),      # b_l
                    pl.BlockSpec(memory_space=pl.ANY),                    # XW0 (HBM)
                ],
                out_specs=pl.BlockSpec((tm, c_pad), lambda l, i: (i, 0)),
                scratch_shapes=[
                    pltpu.VMEM((n_pad, c_pad), jnp.bfloat16),   # XW ping
                    pltpu.VMEM((n_pad, c_pad), jnp.bfloat16),   # XW pong
                    pltpu.SemaphoreType.DMA,                    # XW0 seed DMA
                ],
            ),
            compiler_params=pltpu.CompilerParams(
                # Sequential on one core: layers carry XW, row tiles fill it.
                dimension_semantics=("arbitrary", "arbitrary"),
                vmem_limit_bytes=vmem_limit,
            ),
            cost_estimate=cost,
        )(a_pad, w_stack, b_stack, xw0_pad)

    if a_resident:
        # Constant A block index -> the 2nd pipeline buffer is dead weight.
        # Request a single buffer; silently fall back if the installed JAX /
        # Mosaic rejects pipeline_mode=pl.Buffered(1).
        try:
            out_pad = call(single_buffer_a=True)
        except Exception:
            out_pad = call(single_buffer_a=False)
    else:
        out_pad = call(single_buffer_a=False)

    return out_pad[:n, :out_channels]


# ---------------------------------------------------------------------------
# Path B wrapper: per-layer calls, "parallel" row axis, K-tiled accumulation.
# ---------------------------------------------------------------------------
def _gcn_forward_per_layer(x, a_hat, params, *, phys_vmem,
                           row_tile=None, k_tile=None):
    n = x.shape[0]
    a_dtype = a_hat.dtype
    a_item = jnp.dtype(a_dtype).itemsize

    tm = row_tile if row_tile is not None else (256 if phys_vmem <= (64 << 20) else 512)
    tk = k_tile if k_tile is not None else tm
    n_pad = _round_up(n, _lcm(_lcm(max(tm, 128), max(tk, 128)), 128))
    a_pad = jnp.zeros((n_pad, n_pad), a_dtype).at[:n, :n].set(a_hat)

    h = x
    for w, b in params:
        d_out = w.shape[1]
        c_pad = _round_up(d_out, 128)
        # TODO(synk): dropout before every layer but the first is the eval-mode
        # identity and is skipped here.
        xw = jnp.dot(h, w)                                   # plain XLA (f32)
        xw_pad = jnp.zeros((n_pad, c_pad), jnp.bfloat16)
        xw_pad = xw_pad.at[:n, :d_out].set(xw.astype(jnp.bfloat16))
        b_pad = jnp.zeros((1, c_pad), jnp.float32).at[0, :d_out].set(b)

        vmem_limit = int(min(max(
            2 * tm * tk * a_item + 2 * tk * c_pad * 2
            + 2 * tm * c_pad * 4 + tm * c_pad * 4 + (8 << 20),
            32 << 20), phys_vmem - (8 << 20)))

        h_pad = pl.pallas_call(
            _gcn_layer_kernel,
            out_shape=jax.ShapeDtypeStruct((n_pad, c_pad), jnp.float32),
            grid_spec=pltpu.PrefetchScalarGridSpec(
                num_scalar_prefetch=0,
                grid=(n_pad // tm, n_pad // tk),
                in_specs=[
                    pl.BlockSpec((tm, tk), lambda i, k: (i, k)),       # A_hat tile
                    pl.BlockSpec((tk, c_pad), lambda i, k: (k, 0)),    # XW K-slab
                    pl.BlockSpec((1, c_pad), lambda i, k: (0, 0)),     # bias
                ],
                out_specs=pl.BlockSpec((tm, c_pad), lambda i, k: (i, 0)),
                scratch_shapes=[pltpu.VMEM((tm, c_pad), jnp.float32)],
            ),
            compiler_params=pltpu.CompilerParams(
                # Row tiles are independent -> megacore sharding on v7x.
                dimension_semantics=("parallel", "arbitrary"),
                vmem_limit_bytes=vmem_limit,
            ),
        )(a_pad, xw_pad, b_pad)
        h = h_pad[:n, :d_out]
    return h


# ---------------------------------------------------------------------------
# Full GCN forward: plan selection + dispatch.
# ---------------------------------------------------------------------------
def gcn_forward(x, edge_index, params, *, adjacency_dtype=jnp.bfloat16,
                mode="auto", row_tile=None, k_tile=None):
    assert mode in ("auto", "fused", "per_layer")
    if row_tile is not None:
        assert row_tile % 16 == 0, "row_tile must be a multiple of 16 (bf16 packing)"
    n = x.shape[0]
    a_hat = normalized_adjacency(edge_index, n).astype(adjacency_dtype)
    a_item = jnp.dtype(adjacency_dtype).itemsize

    phys_vmem, num_cores = _chip_info()
    scoped_cap = min(int(phys_vmem * 0.8), phys_vmem - (8 << 20))
    resident_cap = (16 << 20) if phys_vmem <= (64 << 20) else (48 << 20)

    # Kernel channel padding excludes in_channels (X @ W0 is done outside).
    c_pad = _round_up(max(w.shape[1] for w, _ in params), 128)

    def fused_misc_bytes(tm_, n_pad_):
        return (2 * n_pad_ * c_pad * 2 + 2 * c_pad * c_pad * 4
                + 2 * c_pad * 4 + 2 * tm_ * c_pad * 4 + (4 << 20))

    if row_tile is not None:
        tm = row_tile
        n_pad = _round_up(n, _lcm(max(tm, 128), 128))
        a_resident = (n_pad == tm)
        fused_fits = True                      # explicit override (test scale)
    else:
        n_res = _round_up(n, 128)
        a_res_bytes = n_res * n_res * a_item
        if (a_res_bytes <= resident_cap
                and a_res_bytes + fused_misc_bytes(n_res, n_res) <= scoped_cap):
            tm, n_pad, a_resident, fused_fits = n_res, n_res, True, True
        else:
            a_resident = False
            tm = 256 if phys_vmem <= (64 << 20) else 512   # v7x : v5e/v6e
            while True:
                n_pad = _round_up(n, tm)
                if 2 * tm * n_pad * a_item + fused_misc_bytes(tm, n_pad) <= scoped_cap:
                    fused_fits = True
                    break
                if tm <= 128:
                    fused_fits = False         # graceful fallback to Path B
                    break
                tm //= 2

    if mode == "auto":
        # Prefer the fused single-call stack unless it cannot fit VMEM, or the
        # chip has 2 TensorCores (v7x) and A_hat must stream anyway (then the
        # per-layer "parallel" row axis buys ~2x on the dominant aggregation).
        use_fused = fused_fits and (num_cores == 1 or a_resident)
    else:
        use_fused = (mode == "fused")

    if use_fused:
        return _gcn_forward_fused(x, a_hat, params, c_pad=c_pad, tm=tm,
                                  n_pad=n_pad, phys_vmem=phys_vmem)
    return _gcn_forward_per_layer(x, a_hat, params, phys_vmem=phys_vmem,
                                  row_tile=row_tile, k_tile=k_tile)


# ---------------------------------------------------------------------------
# Parameter init + pure-JAX reference
# ---------------------------------------------------------------------------
def init_params(key, in_channels, hidden_channels, out_channels, n_layers):
    """GCN.__init__ builds in->hidden, (n_layers-1) x hidden->hidden, hidden->out."""
    dims = ([in_channels, hidden_channels]
            + [hidden_channels] * (n_layers - 1)
            + [out_channels])
    params = []
    for i in range(len(dims) - 1):
        key, wk = jax.random.split(key)
        fan_in, fan_out = dims[i], dims[i + 1]
        scale = jnp.sqrt(6.0 / (fan_in + fan_out))
        w = jax.random.uniform(wk, (fan_in, fan_out), jnp.float32, -scale, scale)
        b = jnp.zeros((fan_out,), jnp.float32)
        params.append((w, b))
    return params


def gcn_reference(x, edge_index, params):
    a_hat = normalized_adjacency(edge_index, x.shape[0])
    h = x
    for w, b in params:
        xw = jnp.dot(h, w, precision=jax.lax.Precision.HIGHEST)
        h = jnp.maximum(
            jnp.dot(a_hat, xw, precision=jax.lax.Precision.HIGHEST) + b, 0.0)
    return h


if __name__ == "__main__":
    key = jax.random.PRNGKey(0)

    in_channels, hidden_channels, out_channels = 16, 32, 8
    n_layers, dp = 2, 0.5            # -> 3 GCNConv layers; dropout = eval identity

    kx, ks, kd, kp, kx2, ks2, kd2 = jax.random.split(key, 7)

    def make_graph(kx_, ks_, kd_, n_, e_):
        x_ = jax.random.normal(kx_, (n_, in_channels), jnp.float32)
        ei_ = jnp.stack([jax.random.randint(ks_, (e_,), 0, n_, jnp.int32),
                         jax.random.randint(kd_, (e_,), 0, n_, jnp.int32)], axis=0)
        return x_, ei_

    params = init_params(kp, in_channels, hidden_channels, out_channels, n_layers)

    # --- main case: auto mode (fused stack, A_hat resident) -------------------
    x, edge_index = make_graph(kx, ks, kd, 64, 256)
    out = gcn_forward(x, edge_index, params)
    jax.block_until_ready(out)
    assert out.shape == (64, out_channels)
    assert out.dtype == jnp.float32
    assert bool(jnp.all(out >= 0.0))              # module ReLUs the last layer too
    ref = gcn_reference(x, edge_index, params)
    err = float(jnp.max(jnp.abs(out - ref)))
    assert err < 5e-2, f"fused/resident mismatch vs reference: {err}"

    # --- exercise the fused kernel's multi-row-tile (streaming) path ----------
    x2, ei2 = make_graph(kx2, ks2, kd2, 200, 800)
    ref2 = gcn_reference(x2, ei2, params)
    out_stream = gcn_forward(x2, ei2, params, mode="fused", row_tile=32)
    jax.block_until_ready(out_stream)
    err2 = float(jnp.max(jnp.abs(out_stream - ref2)))
    assert err2 < 5e-2, f"fused/streaming mismatch vs reference: {err2}"

    # --- exercise the per-layer ("parallel" rows + K accumulation) fallback ---
    out_pl = gcn_forward(x2, ei2, params, mode="per_layer", row_tile=64, k_tile=128)
    jax.block_until_ready(out_pl)
    err3 = float(jnp.max(jnp.abs(out_pl - ref2)))
    assert err3 < 5e-2, f"per-layer mismatch vs reference: {err3}"

    print("KERNEL_OK")
</pallas_src>

<mosaic_0001>
module attributes {stable_mosaic.version = 11 : i64} {
  func.func @_fused_gcn_kernel(%arg0: i32, %arg1: i32, %arg2: memref<128x128xbf16, #tpu.memory_space<vmem>>, %arg3: memref<1x128x128xf32, #tpu.memory_space<vmem>>, %arg4: memref<1x1x128xf32, #tpu.memory_space<vmem>>, %arg5: memref<128x128xbf16, #tpu.memory_space<any>>, %arg6: memref<128x128xf32, #tpu.memory_space<vmem>>, %arg7: memref<128x128xbf16, #tpu.memory_space<vmem>>, %arg8: memref<128x128xbf16, #tpu.memory_space<vmem>>, %arg9: memref<!tpu.dma_semaphore, #tpu.memory_space<semaphore_mem>>) attributes {dimension_semantics = [#tpu.dimension_semantics<arbitrary>, #tpu.dimension_semantics<arbitrary>], iteration_bounds = array<i64: 3, 1>, scalar_prefetch = 0 : i64, scratch_operands = 3 : i64, tpu.core_type = #tpu.core_type<tc>, window_params = [{pipeline_mode = #tpu.pipeline_mode<synchronous>, transform_indices = @transform_0, window_bounds = array<i64: 128, 128>}, {transform_indices = @transform_1, window_bounds = array<i64: 1, 128, 128>}, {transform_indices = @transform_2, window_bounds = array<i64: 1, 1, 128>}, {}, {transform_indices = @transform_4, window_bounds = array<i64: 128, 128>}]} {
    %c0_i32 = arith.constant 0 : i32
    %0 = arith.cmpi eq, %arg0, %c0_i32 : i32
    %c0_i32_0 = arith.constant 0 : i32
    %1 = arith.cmpi eq, %arg1, %c0_i32_0 : i32
    %2 = arith.andi %0, %1 : i1
    %3 = arith.extui %2 : i1 to i32
    %c0_i32_1 = arith.constant 0 : i32
    %4 = arith.cmpi ne, %3, %c0_i32_1 : i32
    scf.if %4 {
      tpu.enqueue_dma source(%arg5 : memref<128x128xbf16, #tpu.memory_space<any>>) target(%arg7 : memref<128x128xbf16, #tpu.memory_space<vmem>>) target_semaphore(%arg9 : memref<!tpu.dma_semaphore, #tpu.memory_space<semaphore_mem>>)
      tpu.wait_dma2 semaphore(%arg9 : memref<!tpu.dma_semaphore, #tpu.memory_space<semaphore_mem>>) src(%arg5 : memref<128x128xbf16, #tpu.memory_space<any>>) dst(%arg7 : memref<128x128xbf16, #tpu.memory_space<vmem>>)
    } else {
    }
    %c2_i32 = arith.constant 2 : i32
    %c0_i32_2 = arith.constant 0 : i32
    %5 = arith.cmpi eq, %c2_i32, %c0_i32_2 : i32
    %c1_i32 = arith.constant 1 : i32
    %6 = arith.select %5, %c1_i32, %c2_i32 : i32
    %7 = arith.remsi %arg0, %6 : i32
    %c0_i32_3 = arith.constant 0 : i32
    %8 = arith.cmpi ne, %7, %c0_i32_3 : i32
    %c0_i32_4 = arith.constant 0 : i32
    %9 = arith.cmpi slt, %7, %c0_i32_4 : i32
    %c0_i32_5 = arith.constant 0 : i32
    %10 = arith.cmpi slt, %6, %c0_i32_5 : i32
    %11 = arith.xori %9, %10 : i1
    %12 = arith.andi %11, %8 : i1
    %13 = arith.addi %7, %6 : i32
    %14 = arith.select %12, %13, %7 : i32
    %c0_i32_6 = arith.constant 0 : i32
    %15 = arith.cmpi eq, %14, %c0_i32_6 : i32
    %16 = arith.extui %15 : i1 to i32
    %c0_i32_7 = arith.constant 0 : i32
    %17 = arith.cmpi ne, %16, %c0_i32_7 : i32
    scf.if %17 {
      %c0 = arith.constant 0 : index
      %c0_16 = arith.constant 0 : index
      %31 = vector.load %arg2[%c0, %c0_16] : memref<128x128xbf16, #tpu.memory_space<vmem>>, vector<128x128xbf16>
      %c0_17 = arith.constant 0 : index
      %c0_18 = arith.constant 0 : index
      %32 = vector.load %arg7[%c0_17, %c0_18] : memref<128x128xbf16, #tpu.memory_space<vmem>>, vector<128x128xbf16>
      %cst = arith.constant dense<0.000000e+00> : vector<128x128xf32>
      %33 = tpu.matmul %31, %32, %cst {dimension_numbers = #tpu.dot_dimension_numbers<[1], [0], [0], [1], [0, 0, 1, 1], [], []>} : vector<128x128xbf16>, vector<128x128xbf16>, vector<128x128xf32> -> vector<128x128xf32>
      %c0_19 = arith.constant 0 : index
      %c0_20 = arith.constant 0 : index
      %c0_21 = arith.constant 0 : index
      %34 = vector.load %arg4[%c0_19, %c0_20, %c0_21] : memref<1x1x128xf32, #tpu.memory_space<vmem>>, vector<1x1x128xf32>
      %35 = vector.shape_cast %34 : vector<1x1x128xf32> to vector<1x128xf32>
      %36 = vector.broadcast %35 : vector<1x128xf32> to vector<128x128xf32>
      %37 = arith.addf %33, %36 : vector<128x128xf32>
      %cst_22 = arith.constant 0.000000e+00 : f32
      %38 = vector.broadcast %cst_22 : f32 to vector<128x128xf32>
      %39 = arith.maximumf %37, %38 : vector<128x128xf32>
      %c2_i32_23 = arith.constant 2 : i32
      %40 = arith.cmpi slt, %arg0, %c2_i32_23 : i32
      %41 = arith.extui %40 : i1 to i32
      %c0_i32_24 = arith.constant 0 : i32
      %42 = arith.cmpi ne, %41, %c0_i32_24 : i32
      scf.if %42 {
        %c128_i32 = arith.constant 128 : i32
        %46 = arith.muli %arg1, %c128_i32 : i32
        %47 = tpu.assume_multiple %46, 128 : i32
        %c0_27 = arith.constant 0 : index
        %c0_28 = arith.constant 0 : index
        %c0_29 = arith.constant 0 : index
        %48 = vector.load %arg3[%c0_27, %c0_28, %c0_29] : memref<1x128x128xf32, #tpu.memory_space<vmem>>, vector<1x128x128xf32>
        %49 = vector.shape_cast %48 : vector<1x128x128xf32> to vector<128x128xf32>
        %cst_30 = arith.constant dense<0.000000e+00> : vector<128x128xf32>
        %50 = tpu.matmul %39, %49, %cst_30 {dimension_numbers = #tpu.dot_dimension_numbers<[1], [0], [0], [1], [0, 0, 1, 1], [], []>} : vector<128x128xf32>, vector<128x128xf32>, vector<128x128xf32> -> vector<128x128xf32>
        %51 = arith.truncf %50 : vector<128x128xf32> to vector<128x128xbf16>
        %52 = arith.index_cast %47 : i32 to index
        %c0_31 = arith.constant 0 : index
        %53 = vector.load %arg8[%52, %c0_31] : memref<128x128xbf16, #tpu.memory_space<vmem>>, vector<128x128xbf16>
        tpu.vector_store %arg8[%52, %c0_31], %51 {strides = array<i32>} : memref<128x128xbf16, #tpu.memory_space<vmem>>, vector<128x128xbf16>,
      } else {
      }
      %c2_i32_25 = arith.constant 2 : i32
      %43 = arith.cmpi eq, %arg0, %c2_i32_25 : i32
      %44 = arith.extui %43 : i1 to i32
      %c0_i32_26 = arith.constant 0 : i32
      %45 = arith.cmpi ne, %44, %c0_i32_26 : i32
      scf.if %45 {
        %c0_27 = arith.constant 0 : index
        %c0_28 = arith.constant 0 : index
        %46 = vector.load %arg6[%c0_27, %c0_28] : memref<128x128xf32, #tpu.memory_space<vmem>>, vector<128x128xf32>
        tpu.vector_store %arg6[%c0_27, %c0_28], %39 {strides = array<i32>} : memref<128x128xf32, #tpu.memory_space<vmem>>, vector<128x128xf32>,
      } else {
      }
    } else {
    }
    %c2_i32_8 = arith.constant 2 : i32
    %c0_i32_9 = arith.constant 0 : i32
    %18 = arith.cmpi eq, %c2_i32_8, %c0_i32_9 : i32
    %c1_i32_10 = arith.constant 1 : i32
    %19 = arith.select %18, %c1_i32_10, %c2_i32_8 : i32
    %20 = arith.remsi %arg0, %19 : i32
    %c0_i32_11 = arith.constant 0 : i32
    %21 = arith.cmpi ne, %20, %c0_i32_11 : i32
    %c0_i32_12 = arith.constant 0 : i32
    %22 = arith.cmpi slt, %20, %c0_i32_12 : i32
    %c0_i32_13 = arith.constant 0 : i32
    %23 = arith.cmpi slt, %19, %c0_i32_13 : i32
    %24 = arith.xori %22, %23 : i1
    %25 = arith.andi %24, %21 : i1
    %26 = arith.addi %20, %19 : i32
    %27 = arith.select %25, %26, %20 : i32
    %c1_i32_14 = arith.constant 1 : i32
    %28 = arith.cmpi eq, %27, %c1_i32_14 : i32
    %29 = arith.extui %28 : i1 to i32
    %c0_i32_15 = arith.constant 0 : i32
    %30 = arith.cmpi ne, %29, %c0_i32_15 : i32
    scf.if %30 {
      %c0 = arith.constant 0 : index
      %c0_16 = arith.constant 0 : index
      %31 = vector.load %arg2[%c0, %c0_16] : memref<128x128xbf16, #tpu.memory_space<vmem>>, vector<128x128xbf16>
      %c0_17 = arith.constant 0 : index
      %c0_18 = arith.constant 0 : index
      %32 = vector.load %arg8[%c0_17, %c0_18] : memref<128x128xbf16, #tpu.memory_space<vmem>>, vector<128x128xbf16>
      %cst = arith.constant dense<0.000000e+00> : vector<128x128xf32>
      %33 = tpu.matmul %31, %32, %cst {dimension_numbers = #tpu.dot_dimension_numbers<[1], [0], [0], [1], [0, 0, 1, 1], [], []>} : vector<128x128xbf16>, vector<128x128xbf16>, vector<128x128xf32> -> vector<128x128xf32>
      %c0_19 = arith.constant 0 : index
      %c0_20 = arith.constant 0 : index
      %c0_21 = arith.constant 0 : index
      %34 = vector.load %arg4[%c0_19, %c0_20, %c0_21] : memref<1x1x128xf32, #tpu.memory_space<vmem>>, vector<1x1x128xf32>
      %35 = vector.shape_cast %34 : vector<1x1x128xf32> to vector<1x128xf32>
      %36 = vector.broadcast %35 : vector<1x128xf32> to vector<128x128xf32>
      %37 = arith.addf %33, %36 : vector<128x128xf32>
      %cst_22 = arith.constant 0.000000e+00 : f32
      %38 = vector.broadcast %cst_22 : f32 to vector<128x128xf32>
      %39 = arith.maximumf %37, %38 : vector<128x128xf32>
      %c2_i32_23 = arith.constant 2 : i32
      %40 = arith.cmpi slt, %arg0, %c2_i32_23 : i32
      %41 = arith.extui %40 : i1 to i32
      %c0_i32_24 = arith.constant 0 : i32
      %42 = arith.cmpi ne, %41, %c0_i32_24 : i32
      scf.if %42 {
        %c128_i32 = arith.constant 128 : i32
        %46 = arith.muli %arg1, %c128_i32 : i32
        %47 = tpu.assume_multiple %46, 128 : i32
        %c0_27 = arith.constant 0 : index
        %c0_28 = arith.constant 0 : index
        %c0_29 = arith.constant 0 : index
        %48 = vector.load %arg3[%c0_27, %c0_28, %c0_29] : memref<1x128x128xf32, #tpu.memory_space<vmem>>, vector<1x128x128xf32>
        %49 = vector.shape_cast %48 : vector<1x128x128xf32> to vector<128x128xf32>
        %cst_30 = arith.constant dense<0.000000e+00> : vector<128x128xf32>
        %50 = tpu.matmul %39, %49, %cst_30 {dimension_numbers = #tpu.dot_dimension_numbers<[1], [0], [0], [1], [0, 0, 1, 1], [], []>} : vector<128x128xf32>, vector<128x128xf32>, vector<128x128xf32> -> vector<128x128xf32>
        %51 = arith.truncf %50 : vector<128x128xf32> to vector<128x128xbf16>
        %52 = arith.index_cast %47 : i32 to index
        %c0_31 = arith.constant 0 : index
        %53 = vector.load %arg7[%52, %c0_31] : memref<128x128xbf16, #tpu.memory_space<vmem>>, vector<128x128xbf16>
        tpu.vector_store %arg7[%52, %c0_31], %51 {strides = array<i32>} : memref<128x128xbf16, #tpu.memory_space<vmem>>, vector<128x128xbf16>,
      } else {
      }
      %c2_i32_25 = arith.constant 2 : i32
      %43 = arith.cmpi eq, %arg0, %c2_i32_25 : i32
      %44 = arith.extui %43 : i1 to i32
      %c0_i32_26 = arith.constant 0 : i32
      %45 = arith.cmpi ne, %44, %c0_i32_26 : i32
      scf.if %45 {
        %c0_27 = arith.constant 0 : index
        %c0_28 = arith.constant 0 : index
        %46 = vector.load %arg6[%c0_27, %c0_28] : memref<128x128xf32, #tpu.memory_space<vmem>>, vector<128x128xf32>
        tpu.vector_store %arg6[%c0_27, %c0_28], %39 {strides = array<i32>} : memref<128x128xf32, #tpu.memory_space<vmem>>, vector<128x128xf32>,
      } else {
      }
    } else {
    }
    return
  }
  func.func @transform_0(%arg0: i32, %arg1: i32) -> (i32, i32) {
    %c0_i32 = arith.constant 0 : i32
    %c0_i32_0 = arith.constant 0 : i32
    return %arg1, %c0_i32 : i32, i32
  }
  func.func @transform_1(%arg0: i32, %arg1: i32) -> (i32, i32, i32) {
    %c0_i32 = arith.constant 0 : i32
    %c0_i32_0 = arith.constant 0 : i32
    %c0_i32_1 = arith.constant 0 : i32
    return %arg0, %c0_i32, %c0_i32_0 : i32, i32, i32
  }
  func.func @transform_2(%arg0: i32, %arg1: i32) -> (i32, i32, i32) {
    %c0_i32 = arith.constant 0 : i32
    %c0_i32_0 = arith.constant 0 : i32
    %c0_i32_1 = arith.constant 0 : i32
    return %arg0, %c0_i32, %c0_i32_0 : i32, i32, i32
  }
  func.func @transform_4(%arg0: i32, %arg1: i32) -> (i32, i32) {
    %c0_i32 = arith.constant 0 : i32
    %c0_i32_0 = arith.constant 0 : i32
    return %arg1, %c0_i32 : i32, i32
  }
}

module attributes {stable_mosaic.version = 11 : i64} {
  func.func @_fused_gcn_kernel(%arg0: i32, %arg1: i32, %arg2: memref<128x128xbf16, #tpu.memory_space<vmem>>, %arg3: memref<1x128x128xf32, #tpu.memory_space<vmem>>, %arg4: memref<1x1x128xf32, #tpu.memory_space<vmem>>, %arg5: memref<128x128xbf16, #tpu.memory_space<any>>, %arg6: memref<128x128xf32, #tpu.memory_space<vmem>>, %arg7: memref<128x128xbf16, #tpu.memory_space<vmem>>, %arg8: memref<128x128xbf16, #tpu.memory_space<vmem>>, %arg9: memref<!tpu.dma_semaphore, #tpu.memory_space<semaphore_mem>>) attributes {dimension_semantics = [#tpu.dimension_semantics<arbitrary>, #tpu.dimension_semantics<arbitrary>], iteration_bounds = array<i64: 3, 1>, scalar_prefetch = 0 : i64, scratch_operands = 3 : i64, tpu.core_type = #tpu.core_type<tc>, window_params = [{transform_indices = @transform_0, window_bounds = array<i64: 128, 128>}, {transform_indices = @transform_1, window_bounds = array<i64: 1, 128, 128>}, {transform_indices = @transform_2, window_bounds = array<i64: 1, 1, 128>}, {}, {transform_indices = @transform_4, window_bounds = array<i64: 128, 128>}]} {
    %c0_i32 = arith.constant 0 : i32
    %0 = arith.cmpi eq, %arg0, %c0_i32 : i32
    %c0_i32_0 = arith.constant 0 : i32
    %1 = arith.cmpi eq, %arg1, %c0_i32_0 : i32
    %2 = arith.andi %0, %1 : i1
    %3 = arith.extui %2 : i1 to i32
    %c0_i32_1 = arith.constant 0 : i32
    %4 = arith.cmpi ne, %3, %c0_i32_1 : i32
    scf.if %4 {
      tpu.enqueue_dma source(%arg5 : memref<128x128xbf16, #tpu.memory_space<any>>) target(%arg7 : memref<128x128xbf16, #tpu.memory_space<vmem>>) target_semaphore(%arg9 : memref<!tpu.dma_semaphore, #tpu.memory_space<semaphore_mem>>)
      tpu.wait_dma2 semaphore(%arg9 : memref<!tpu.dma_semaphore, #tpu.memory_space<semaphore_mem>>) src(%arg5 : memref<128x128xbf16, #tpu.memory_space<any>>) dst(%arg7 : memref<128x128xbf16, #tpu.memory_space<vmem>>)
    } else {
    }
    %c2_i32 = arith.constant 2 : i32
    %c0_i32_2 = arith.constant 0 : i32
    %5 = arith.cmpi eq, %c2_i32, %c0_i32_2 : i32
    %c1_i32 = arith.constant 1 : i32
    %6 = arith.select %5, %c1_i32, %c2_i32 : i32
    %7 = arith.remsi %arg0, %6 : i32
    %c0_i32_3 = arith.constant 0 : i32
    %8 = arith.cmpi ne, %7, %c0_i32_3 : i32
    %c0_i32_4 = arith.constant 0 : i32
    %9 = arith.cmpi slt, %7, %c0_i32_4 : i32
    %c0_i32_5 = arith.constant 0 : i32
    %10 = arith.cmpi slt, %6, %c0_i32_5 : i32
    %11 = arith.xori %9, %10 : i1
    %12 = arith.andi %11, %8 : i1
    %13 = arith.addi %7, %6 : i32
    %14 = arith.select %12, %13, %7 : i32
    %c0_i32_6 = arith.constant 0 : i32
    %15 = arith.cmpi eq, %14, %c0_i32_6 : i32
    %16 = arith.extui %15 : i1 to i32
    %c0_i32_7 = arith.constant 0 : i32
    %17 = arith.cmpi ne, %16, %c0_i32_7 : i32
    scf.if %17 {
      %c0 = arith.constant 0 : index
      %c0_16 = arith.constant 0 : index
      %31 = vector.load %arg2[%c0, %c0_16] : memref<128x128xbf16, #tpu.memory_space<vmem>>, vector<128x128xbf16>
      %c0_17 = arith.constant 0 : index
      %c0_18 = arith.constant 0 : index
      %32 = vector.load %arg7[%c0_17, %c0_18] : memref<128x128xbf16, #tpu.memory_space<vmem>>, vector<128x128xbf16>
      %cst = arith.constant dense<0.000000e+00> : vector<128x128xf32>
      %33 = tpu.matmul %31, %32, %cst {dimension_numbers = #tpu.dot_dimension_numbers<[1], [0], [0], [1], [0, 0, 1, 1], [], []>} : vector<128x128xbf16>, vector<128x128xbf16>, vector<128x128xf32> -> vector<128x128xf32>
      %c0_19 = arith.constant 0 : index
      %c0_20 = arith.constant 0 : index
      %c0_21 = arith.constant 0 : index
      %34 = vector.load %arg4[%c0_19, %c0_20, %c0_21] : memref<1x1x128xf32, #tpu.memory_space<vmem>>, vector<1x1x128xf32>
      %35 = vector.shape_cast %34 : vector<1x1x128xf32> to vector<1x128xf32>
      %36 = vector.broadcast %35 : vector<1x128xf32> to vector<128x128xf32>
      %37 = arith.addf %33, %36 : vector<128x128xf32>
      %cst_22 = arith.constant 0.000000e+00 : f32
      %38 = vector.broadcast %cst_22 : f32 to vector<128x128xf32>
      %39 = arith.maximumf %37, %38 : vector<128x128xf32>
      %c2_i32_23 = arith.constant 2 : i32
      %40 = arith.cmpi slt, %arg0, %c2_i32_23 : i32
      %41 = arith.extui %40 : i1 to i32
      %c0_i32_24 = arith.constant 0 : i32
      %42 = arith.cmpi ne, %41, %c0_i32_24 : i32
      scf.if %42 {
        %c128_i32 = arith.constant 128 : i32
        %46 = arith.muli %arg1, %c128_i32 : i32
        %47 = tpu.assume_multiple %46, 128 : i32
        %c0_27 = arith.constant 0 : index
        %c0_28 = arith.constant 0 : index
        %c0_29 = arith.constant 0 : index
        %48 = vector.load %arg3[%c0_27, %c0_28, %c0_29] : memref<1x128x128xf32, #tpu.memory_space<vmem>>, vector<1x128x128xf32>
        %49 = vector.shape_cast %48 : vector<1x128x128xf32> to vector<128x128xf32>
        %cst_30 = arith.constant dense<0.000000e+00> : vector<128x128xf32>
        %50 = tpu.matmul %39, %49, %cst_30 {dimension_numbers = #tpu.dot_dimension_numbers<[1], [0], [0], [1], [0, 0, 1, 1], [], []>} : vector<128x128xf32>, vector<128x128xf32>, vector<128x128xf32> -> vector<128x128xf32>
        %51 = arith.truncf %50 : vector<128x128xf32> to vector<128x128xbf16>
        %52 = arith.index_cast %47 : i32 to index
        %c0_31 = arith.constant 0 : index
        %53 = vector.load %arg8[%52, %c0_31] : memref<128x128xbf16, #tpu.memory_space<vmem>>, vector<128x128xbf16>
        tpu.vector_store %arg8[%52, %c0_31], %51 {strides = array<i32>} : memref<128x128xbf16, #tpu.memory_space<vmem>>, vector<128x128xbf16>,
      } else {
      }
      %c2_i32_25 = arith.constant 2 : i32
      %43 = arith.cmpi eq, %arg0, %c2_i32_25 : i32
      %44 = arith.extui %43 : i1 to i32
      %c0_i32_26 = arith.constant 0 : i32
      %45 = arith.cmpi ne, %44, %c0_i32_26 : i32
      scf.if %45 {
        %c0_27 = arith.constant 0 : index
        %c0_28 = arith.constant 0 : index
        %46 = vector.load %arg6[%c0_27, %c0_28] : memref<128x128xf32, #tpu.memory_space<vmem>>, vector<128x128xf32>
        tpu.vector_store %arg6[%c0_27, %c0_28], %39 {strides = array<i32>} : memref<128x128xf32, #tpu.memory_space<vmem>>, vector<128x128xf32>,
      } else {
      }
    } else {
    }
    %c2_i32_8 = arith.constant 2 : i32
    %c0_i32_9 = arith.constant 0 : i32
    %18 = arith.cmpi eq, %c2_i32_8, %c0_i32_9 : i32
    %c1_i32_10 = arith.constant 1 : i32
    %19 = arith.select %18, %c1_i32_10, %c2_i32_8 : i32
    %20 = arith.remsi %arg0, %19 : i32
    %c0_i32_11 = arith.constant 0 : i32
    %21 = arith.cmpi ne, %20, %c0_i32_11 : i32
    %c0_i32_12 = arith.constant 0 : i32
    %22 = arith.cmpi slt, %20, %c0_i32_12 : i32
    %c0_i32_13 = arith.constant 0 : i32
    %23 = arith.cmpi slt, %19, %c0_i32_13 : i32
    %24 = arith.xori %22, %23 : i1
    %25 = arith.andi %24, %21 : i1
    %26 = arith.addi %20, %19 : i32
    %27 = arith.select %25, %26, %20 : i32
    %c1_i32_14 = arith.constant 1 : i32
    %28 = arith.cmpi eq, %27, %c1_i32_14 : i32
    %29 = arith.extui %28 : i1 to i32
    %c0_i32_15 = arith.constant 0 : i32
    %30 = arith.cmpi ne, %29, %c0_i32_15 : i32
    scf.if %30 {
      %c0 = arith.constant 0 : index
      %c0_16 = arith.constant 0 : index
      %31 = vector.load %arg2[%c0, %c0_16] : memref<128x128xbf16, #tpu.memory_space<vmem>>, vector<128x128xbf16>
      %c0_17 = arith.constant 0 : index
      %c0_18 = arith.constant 0 : index
      %32 = vector.load %arg8[%c0_17, %c0_18] : memref<128x128xbf16, #tpu.memory_space<vmem>>, vector<128x128xbf16>
      %cst = arith.constant dense<0.000000e+00> : vector<128x128xf32>
      %33 = tpu.matmul %31, %32, %cst {dimension_numbers = #tpu.dot_dimension_numbers<[1], [0], [0], [1], [0, 0, 1, 1], [], []>} : vector<128x128xbf16>, vector<128x128xbf16>, vector<128x128xf32> -> vector<128x128xf32>
      %c0_19 = arith.constant 0 : index
      %c0_20 = arith.constant 0 : index
      %c0_21 = arith.constant 0 : index
      %34 = vector.load %arg4[%c0_19, %c0_20, %c0_21] : memref<1x1x128xf32, #tpu.memory_space<vmem>>, vector<1x1x128xf32>
      %35 = vector.shape_cast %34 : vector<1x1x128xf32> to vector<1x128xf32>
      %36 = vector.broadcast %35 : vector<1x128xf32> to vector<128x128xf32>
      %37 = arith.addf %33, %36 : vector<128x128xf32>
      %cst_22 = arith.constant 0.000000e+00 : f32
      %38 = vector.broadcast %cst_22 : f32 to vector<128x128xf32>
      %39 = arith.maximumf %37, %38 : vector<128x128xf32>
      %c2_i32_23 = arith.constant 2 : i32
      %40 = arith.cmpi slt, %arg0, %c2_i32_23 : i32
      %41 = arith.extui %40 : i1 to i32
      %c0_i32_24 = arith.constant 0 : i32
      %42 = arith.cmpi ne, %41, %c0_i32_24 : i32
      scf.if %42 {
        %c128_i32 = arith.constant 128 : i32
        %46 = arith.muli %arg1, %c128_i32 : i32
        %47 = tpu.assume_multiple %46, 128 : i32
        %c0_27 = arith.constant 0 : index
        %c0_28 = arith.constant 0 : index
        %c0_29 = arith.constant 0 : index
        %48 = vector.load %arg3[%c0_27, %c0_28, %c0_29] : memref<1x128x128xf32, #tpu.memory_space<vmem>>, vector<1x128x128xf32>
        %49 = vector.shape_cast %48 : vector<1x128x128xf32> to vector<128x128xf32>
        %cst_30 = arith.constant dense<0.000000e+00> : vector<128x128xf32>
        %50 = tpu.matmul %39, %49, %cst_30 {dimension_numbers = #tpu.dot_dimension_numbers<[1], [0], [0], [1], [0, 0, 1, 1], [], []>} : vector<128x128xf32>, vector<128x128xf32>, vector<128x128xf32> -> vector<128x128xf32>
        %51 = arith.truncf %50 : vector<128x128xf32> to vector<128x128xbf16>
        %52 = arith.index_cast %47 : i32 to index
        %c0_31 = arith.constant 0 : index
        %53 = vector.load %arg7[%52, %c0_31] : memref<128x128xbf16, #tpu.memory_space<vmem>>, vector<128x128xbf16>
        tpu.vector_store %arg7[%52, %c0_31], %51 {strides = array<i32>} : memref<128x128xbf16, #tpu.memory_space<vmem>>, vector<128x128xbf16>,
      } else {
      }
      %c2_i32_25 = arith.constant 2 : i32
      %43 = arith.cmpi eq, %arg0, %c2_i32_25 : i32
      %44 = arith.extui %43 : i1 to i32
      %c0_i32_26 = arith.constant 0 : i32
      %45 = arith.cmpi ne, %44, %c0_i32_26 : i32
      scf.if %45 {
        %c0_27 = arith.constant 0 : index
        %c0_28 = arith.constant 0 : index
        %46 = vector.load %arg6[%c0_27, %c0_28] : memref<128x128xf32, #tpu.memory_space<vmem>>, vector<128x128xf32>
        tpu.vector_store %arg6[%c0_27, %c0_28], %39 {strides = array<i32>} : memref<128x128xf32, #tpu.memory_space<vmem>>, vector<128x128xf32>,
      } else {
      }
    } else {
    }
    return
  }
  func.func @transform_0(%arg0: i32, %arg1: i32) -> (i32, i32) {
    %c0_i32 = arith.constant 0 : i32
    %c0_i32_0 = arith.constant 0 : i32
    return %arg1, %c0_i32 : i32, i32
  }
  func.func @transform_1(%arg0: i32, %arg1: i32) -> (i32, i32, i32) {
    %c0_i32 = arith.constant 0 : i32
    %c0_i32_0 = arith.constant 0 : i32
    %c0_i32_1 = arith.constant 0 : i32
    return %arg0, %c0_i32, %c0_i32_0 : i32, i32, i32
  }
  func.func @transform_2(%arg0: i32, %arg1: i32) -> (i32, i32, i32) {
    %c0_i32 = arith.constant 0 : i32
    %c0_i32_0 = arith.constant 0 : i32
    %c0_i32_1 = arith.constant 0 : i32
    return %arg0, %c0_i32, %c0_i32_0 : i32, i32, i32
  }
  func.func @transform_4(%arg0: i32, %arg1: i32) -> (i32, i32) {
    %c0_i32 = arith.constant 0 : i32
    %c0_i32_0 = arith.constant 0 : i32
    return %arg1, %c0_i32 : i32, i32
  }
}

</mosaic_0001>

<llo_original>
// kernel: tpu_custom_call.1
$region0: #{tpu_custom_call.1}
  #allocation0 [shape = 'u32[]', space=smem, size = 0x4, offset = 0x4, fixed_abs, tag = 'smem constant byte address 0x4 - core index']
  #allocation1 [shape = 'u32[144,128]{1,0:T(1,128)}', space=vmem, size = 0x12000, scoped, tag = 'internal scratch']
  #allocation2 [shape = 'bf16[128,128]{1,0:T(16,128)(2,1)}', space=vmem, size = 0x8000, scoped, tag = 'scratch operand']
  #allocation3 [shape = 'bf16[128,128]{1,0:T(16,128)(2,1)}', space=vmem, size = 0x8000, scoped, tag = 'scratch operand']
  #allocation4 [shape = 's32[1]{0}', space=sflag, size = 0x4, scoped, tag = 'scratch operand']
  #allocation11 [shape = 's32[]', space=sflag, size = 0x4, offset = 0, fixed_abs, tag = 'sflag constant byte address 0x0 - dummy sync flag']
  #allocation12 [shape = 's32[]', space=sflag, size = 0x4, offset = 0, fixed_abs, tag = 'sflag constant byte address 0x0 - dummy sync flag']
  #allocation13 [shape = 'u32[]', space=smem, size = 0x4, offset = 0x44, fixed_abs, tag = 'smem constant byte address 0x44 - assertion arg 0']
  #allocation14 [shape = 'u32[]', space=smem, size = 0x4, offset = 0x48, fixed_abs, tag = 'smem constant byte address 0x48 - assertion arg 1']
  %s0 = inlined_call_operand.hbm [shape: bf16[128,128], index: 0, kind: input, shape index: {}]
  %s1 = inlined_call_operand.hbm [shape: f32[3,128,128], index: 1, kind: input, shape index: {}]
  %s2 = inlined_call_operand.vmem [shape: f32[3,1,128], index: 2, kind: input, shape index: {}]
  %s3 = inlined_call_operand.hbm [shape: bf16[128,128], index: 3, kind: input, shape index: {}]
  %s4 = inlined_call_operand.hbm [shape: f32[128,128], index: 4, kind: output, shape index: {}]
  %s5 = sld [smem:[#allocation0]]
  $region85: #{tpu_custom_call.1} parent=0
    _
  %s7 = ssub.s32 1, %s5
  %s8 = scalar_select 0, %s7, %s5
  $region1: #{tpu_custom_call.1} parent=0
    #allocation5 [shape = 'u8[32768]{0}', space=vmem, size = 0x8000, scoped, tag = 'input window, operand 0, single buffered']
    #allocation6 [shape = 's32[2]{0}', space=sflag, size = 0x8, scoped, tag = 'scoped memory for tpu_custom_call.1']
    #allocation7 [shape = 's32[2]{0}', space=sflag, size = 0x8, scoped, tag = 'scoped memory for tpu_custom_call.1']
    #allocation8 [shape = 'u8[131072]{0}', space=vmem, size = 0x20000, scoped, tag = 'input window, operand 1']
    #allocation9 [shape = 's32[2]{0}', space=sflag, size = 0x8, scoped, tag = 'scoped memory for tpu_custom_call.1']
    #allocation10 [shape = 'u8[65536]{0}', space=vmem, size = 0x10000, scoped, tag = 'output window, operand 0, single buffered']
    %9 = vsyncpa [#allocation6], 0
    %10 = vsyncpa [#allocation9], 0
    %s11 = scalar_lea.sflag [#allocation9], 1
    %12 = vsyncpa %s11, 0
    %13 = vsyncpa [#allocation7], 0
    loop: start=0, step=1, limit=5
    $region2: #{tpu_custom_call.1} parent=1 // loop_pre_header
      _
    $region3: #{tpu_custom_call.1} parent=1 // loop_header
      %s15 = sphi 0, %s19
      %p16 = scmp.ge.s32.totalorder %s15, 5
      %s22 = sphi 0, %s34
      %s23 = sphi 0, %s30
      %s24 = sphi 0, %s22
      %s25 = sphi 0, %s23
      %s26 = sphi 0, %s24
      %s27 = sphi 0, %s25
      %s37 = sphi 0, %s39
      %s40 = sphi 0, %s37
      %s41 = sphi 0, %s40
      %s57 = sphi 0, %s41
      %s63 = sphi 0, %s65
      %s66 = sphi 0, %s63
      %s67 = sphi 0, %s66
      %s83 = sphi 0, %s67
      %s89 = sphi 0, %s91
      %s92 = sphi 0, %s89
      %s93 = sphi 0, %s92
      %s109 = sphi 0, %s93
      %s115 = sphi 0, %s117
      %s118 = sphi 0, %s115
      %s119 = sphi 0, %s118
      %s135 = sphi 0, %s119
    $region4: #{tpu_custom_call.1} parent=1 // loop_header_branch
      %18 = sbr.rel (%p16) target = $region8
    $region5: #{tpu_custom_call.1} parent=1 // loop_body
      %s20 = ssub.s32 %s15, 1
      %s21 = ssub.s32 %s15, 2
      %s28 = sadd.s32 1, %s23
      %p29 = scmp.ge.s32.totalorder %s28, 1
      %s30 = scalar_select %p29, 0, %s28
      %s31 = sadd.s32 1, %s22
      %s32 = scalar_select %p29, %s31, %s22
      %p33 = scmp.ge.s32.totalorder %s32, 3
      %s34 = scalar_select %p33, 0, %s32
      %s35 = ssub.s32 %s23, %s30
      %p36 = scmp.eq.s32.totalorder %s35, 0
      %s38 = sadd.s32 %s37, 1
      %s39 = scalar_select %p36, %s37, %s38
      %p42 = pneg %p36
      %p43 = scmp.eq.s32.totalorder %s15, 2
      %p44 = por %p42, %p43
      %p45 = scmp.ne.s32.totalorder %s37, %s40
      %p46 = scmp.eq.s32.totalorder %s15, 0
      %p47 = por %p45, %p46
      %p48 = scmp.ne.s32.totalorder %s37, %s40
      %p49 = scmp.eq.s32.totalorder %s20, 2
      %p50 = por %p48, %p49
      %p51 = scmp.ne.s32.totalorder %s40, %s41
      %p52 = scmp.eq.s32.totalorder %s20, 0
      %p53 = por %p51, %p52
      %p54 = scmp.ne.s32.totalorder %s40, %s41
      %p55 = scmp.eq.s32.totalorder %s21, 2
      %p56 = por %p54, %p55
      %p58 = scmp.ne.s32.totalorder %s41, %s57
      %p59 = scmp.eq.s32.totalorder %s21, 0
      %p60 = por %p58, %p59
      %s61 = ssub.s32 %s22, %s34
      %p62 = scmp.eq.s32.totalorder %s61, 0
      %s64 = sadd.s32 %s63, 1
      %s65 = scalar_select %p62, %s63, %s64
      %p68 = pneg %p62
      %p69 = scmp.eq.s32.totalorder %s15, 2
      %p70 = por %p68, %p69
      %p71 = scmp.ne.s32.totalorder %s63, %s66
      %p72 = scmp.eq.s32.totalorder %s15, 0
      %p73 = por %p71, %p72
      %p74 = scmp.ne.s32.totalorder %s63, %s66
      %p75 = scmp.eq.s32.totalorder %s20, 2
      %p76 = por %p74, %p75
      %p77 = scmp.ne.s32.totalorder %s66, %s67
      %p78 = scmp.eq.s32.totalorder %s20, 0
      %p79 = por %p77, %p78
      %p80 = scmp.ne.s32.totalorder %s66, %s67
      %p81 = scmp.eq.s32.totalorder %s21, 2
      %p82 = por %p80, %p81
      %p84 = scmp.ne.s32.totalorder %s67, %s83
      %p85 = scmp.eq.s32.totalorder %s21, 0
      %p86 = por %p84, %p85
      %s87 = ssub.s32 %s22, %s34
      %p88 = scmp.eq.s32.totalorder %s87, 0
      %s90 = sadd.s32 %s89, 1
      %s91 = scalar_select %p88, %s89, %s90
      %p94 = pneg %p88
      %p95 = scmp.eq.s32.totalorder %s15, 2
      %p96 = por %p94, %p95
      %p97 = scmp.ne.s32.totalorder %s89, %s92
      %p98 = scmp.eq.s32.totalorder %s15, 0
      %p99 = por %p97, %p98
      %p100 = scmp.ne.s32.totalorder %s89, %s92
      %p101 = scmp.eq.s32.totalorder %s20, 2
      %p102 = por %p100, %p101
      %p103 = scmp.ne.s32.totalorder %s92, %s93
      %p104 = scmp.eq.s32.totalorder %s20, 0
      %p105 = por %p103, %p104
      %p106 = scmp.ne.s32.totalorder %s92, %s93
      %p107 = scmp.eq.s32.totalorder %s21, 2
      %p108 = por %p106, %p107
      %p110 = scmp.ne.s32.totalorder %s93, %s109
      %p111 = scmp.eq.s32.totalorder %s21, 0
      %p112 = por %p110, %p111
      %s113 = ssub.s32 %s23, %s30
      %p114 = scmp.eq.s32.totalorder %s113, 0
      %s116 = sadd.s32 %s115, 1
      %s117 = scalar_select %p114, %s115, %s116
      %p120 = pneg %p114
      %p121 = scmp.eq.s32.totalorder %s15, 2
      %p122 = por %p120, %p121
      %p123 = scmp.ne.s32.totalorder %s115, %s118
      %p124 = scmp.eq.s32.totalorder %s15, 0
      %p125 = por %p123, %p124
      %p126 = scmp.ne.s32.totalorder %s115, %s118
      %p127 = scmp.eq.s32.totalorder %s20, 2
      %p128 = por %p126, %p127
      %p129 = scmp.ne.s32.totalorder %s118, %s119
      %p130 = scmp.eq.s32.totalorder %s20, 0
      %p131 = por %p129, %p130
      %p132 = scmp.ne.s32.totalorder %s118, %s119
      %p133 = scmp.eq.s32.totalorder %s21, 2
      %p134 = por %p132, %p133
      %p136 = scmp.ne.s32.totalorder %s119, %s135
      %p137 = scmp.eq.s32.totalorder %s21, 0
      %p138 = por %p136, %p137
      %p139 = scmp.le.s32.totalorder 1, %s15
      %p140 = scmp.lt.s32.totalorder %s15, 4
      %p141 = pnand %p139, %p140
      %p142 = pneg %p141
      // Predicated region
      $region9: #{tpu_custom_call.1} parent=5 // pred_check
        _
      $region10: #{tpu_custom_call.1} parent=5 // pred_check_branch
        %144 = sbr.rel (%p141) target = $region12
      $region11: #{tpu_custom_call.1} parent=5 // pred_region
        %s145 = ssub.s32 %s15, 1
        // Predicated region
        $region13: #{tpu_custom_call.1} parent=11 // pred_check
          %p146 = pneg %p53
        $region14: #{tpu_custom_call.1} parent=11 // pred_check_branch
          %148 = sbr.rel (%p146) target = $region16
        $region15: #{tpu_custom_call.1} parent=11 // pred_region
          %s149 = smul.u32 16, %s25
          %s151 = ssub.s32 1024, 1024
          %152 = vsyncadd [#allocation6], %s151
          %s153 = smul.addr %s149, 64
          %s154 = scalar_lea.hbm %s0, %s153
          %s155 = sshll.u32 [#allocation5], 4
          %s156 = int_to_ptr.vmem [resolvable:$true] %s155
          %161 = dma.hbm_to_vmem [thread:$0]  %s154, 1024, %s156, [#allocation6], 64, 64, 4
        $region16: #{tpu_custom_call.1} parent=11 // pred_fallthru
          _
      $region12: #{tpu_custom_call.1} parent=5 // pred_fallthru
        _
      %p162 = scmp.lt.s32.totalorder %s15, 3
      // Predicated region
      $region17: #{tpu_custom_call.1} parent=5 // pred_check
        %p163 = pneg %p162
      $region18: #{tpu_custom_call.1} parent=5 // pred_check_branch
        %165 = sbr.rel (%p163) target = $region20
      $region19: #{tpu_custom_call.1} parent=5 // pred_region
        // Predicated region
        $region21: #{tpu_custom_call.1} parent=19 // pred_check
          %p166 = pneg %p73
        $region22: #{tpu_custom_call.1} parent=19 // pred_check_branch
          %168 = sbr.rel (%p166) target = $region24
        $region23: #{tpu_custom_call.1} parent=19 // pred_region
          %s169 = sand.u32 %s63, 1
          %s170 = scalar_lea.sflag [#allocation9], %s169
          %s171 = sand.u32 %s63, 1
          %s172 = smul.addr %s171, 128
          %s173 = scalar_lea.vmem [#allocation8], %s172
          %s175 = ssub.s32 2048, 2048
          %176 = vsyncadd %s170, %s175
          %s177 = smul.addr %s22, 16
          %s178 = smul.addr %s177, 128
          %s179 = scalar_lea.hbm %s1, %s178
          %s180 = sshll.u32 %s173, 4
          %s181 = int_to_ptr.vmem [resolvable:$true] %s180
          %186 = dma.hbm_to_vmem [thread:$0]  %s179, 2048, %s181, %s170, 128, 128, 8
        $region24: #{tpu_custom_call.1} parent=19 // pred_fallthru
          _
        // Predicated region
        $region25: #{tpu_custom_call.1} parent=19 // pred_check
          %p187 = pneg %p99
        $region26: #{tpu_custom_call.1} parent=19 // pred_check_branch
          %189 = sbr.rel (%p187) target = $region28
        $region27: #{tpu_custom_call.1} parent=19 // pred_region
          %p190 = scmp.lt.s32.totalorder %s22, 2
          %s191 = scalar_select %p190, %s22, 2
          %s192 = scalar_lea.vmem %s2, %s191
        $region28: #{tpu_custom_call.1} parent=19 // pred_fallthru
          _
      $region20: #{tpu_custom_call.1} parent=5 // pred_fallthru
        _
      %p193 = scmp.le.s32.totalorder 1, %s15
      %p194 = scmp.lt.s32.totalorder %s15, 4
      %p195 = pnand %p193, %p194
      %p196 = pneg %p195
      // Predicated region
      $region29: #{tpu_custom_call.1} parent=5 // pred_check
        _
      $region30: #{tpu_custom_call.1} parent=5 // pred_check_branch
        %198 = sbr.rel (%p195) target = $region32
      $region31: #{tpu_custom_call.1} parent=5 // pred_region
        %s199 = ssub.s32 %s15, 1
        // Predicated region
        $region33: #{tpu_custom_call.1} parent=31 // pred_check
          %p200 = pneg %p53
        $region34: #{tpu_custom_call.1} parent=31 // pred_check_branch
          %202 = sbr.rel (%p200) target = $region36
        $region35: #{tpu_custom_call.1} parent=31 // pred_region
          %203 = dma.done [#allocation6], 1024
        $region36: #{tpu_custom_call.1} parent=31 // pred_fallthru
          _
        %s204 = sand.u32 %s66, 1
        %s205 = scalar_lea.sflag [#allocation9], %s204
        %s206 = sand.u32 %s66, 1
        %s207 = smul.addr %s206, 128
        %s208 = scalar_lea.vmem [#allocation8], %s207
        // Predicated region
        $region37: #{tpu_custom_call.1} parent=31 // pred_check
          %p209 = pneg %p79
        $region38: #{tpu_custom_call.1} parent=31 // pred_check_branch
          %211 = sbr.rel (%p209) target = $region40
        $region39: #{tpu_custom_call.1} parent=31 // pred_region
          %212 = dma.done %s205, 2048
        $region40: #{tpu_custom_call.1} parent=31 // pred_fallthru
          _
        %p213 = pneg %p53
        %p214 = pneg %p50
        %s215 = sand.u32 %s66, 1
        %s216 = scalar_lea.sflag [#allocation9], %s215
        %s217 = sand.u32 %s66, 1
        %s218 = smul.addr %s217, 128
        %s219 = scalar_lea.vmem [#allocation8], %s218
        %p220 = pneg %p79
        %p221 = pneg %p76
        %p222 = scmp.lt.s32.totalorder %s24, 2
        %s223 = scalar_select %p222, %s24, 2
        %s224 = scalar_lea.vmem %s2, %s223
        %p225 = pneg %p105
        %p226 = pneg %p102
        %p227 = pneg %p131
        %p228 = pneg %p128
        %s229 = smul.u32 16, %s25
        %p230 = scmp.lt.s32.totalorder %s24, 2
        %s231 = scalar_select %p230, %s24, 2
        %s232 = scalar_lea.vmem %s2, %s231
        %s233 = smul.u32 16, %s25
        %p235 = scmp.eq.s32.totalorder %s24, 0
        %p236 = scmp.eq.s32.totalorder %s25, 0
        %p237 = pnand %p235, %p236
        %p238 = pneg %p237
        // Predicated region
        $region41: #{tpu_custom_call.1} parent=31 // pred_check
          _
        $region42: #{tpu_custom_call.1} parent=31 // pred_check_branch
          %240 = sbr.rel (%p237) target = $region44
        $region43: #{tpu_custom_call.1} parent=31 // pred_region
          // Predicated region
          $region45: #{tpu_custom_call.1} parent=43 // pred_check
            _
          $region46: #{tpu_custom_call.1} parent=43 // pred_check_branch
            %242 = sbr.rel target = $region48
          $region47: #{tpu_custom_call.1} parent=43 // pred_region
            %243 = sst [smem:[#allocation13]] [#allocation12]
            %244 = sst [smem:[#allocation14]] [#allocation11]
          $region48: #{tpu_custom_call.1} parent=43 // pred_fallthru
            _
          %246 = shalt.err (0)
          %s248 = sshll.u32 [#allocation2], 4
          %s249 = int_to_ptr.vmem [resolvable:$true] %s248
          %251 = dma.hbm_to_vmem [thread:$0]  %s3, 1024, %s249, [#allocation4]
          %s252 = smul.u32 4, 16
          %s253 = smul.u32 %s252, 1
          %s254 = sshll.u32 %s253, 4
          %255 = dma.done [#allocation4], %s254
        $region44: #{tpu_custom_call.1} parent=31 // pred_fallthru
          _
        %p256 = scmp.lt.s32.totalorder %s24, 0
        %s257 = ssub.s32 0, %s24
        %s258 = scalar_select %p256, %s257, %s24
        %s259 = sand.u32 %s258, 1
        %s260 = ssub.s32 0, %s259
        %s261 = scalar_select %p256, %s260, %s259
        %p262 = scmp.ne.s32.totalorder %s261, 0
        %p263 = scmp.lt.s32.totalorder %s261, 0
        %p264 = pnand %p263, %p262
        %p265 = pneg %p264
        %s266 = sadd.s32 %s261, 2
        %s267 = scalar_select %p265, %s266, %s261
        %p268 = scmp.eq.s32.totalorder %s267, 0
        // Predicated region
        $region49: #{tpu_custom_call.1} parent=31 // pred_check
          %p269 = pneg %p268
        $region50: #{tpu_custom_call.1} parent=31 // pred_check_branch
          %271 = sbr.rel (%p269) target = $region52
        $region51: #{tpu_custom_call.1} parent=31 // pred_region
          %v272 = vld [vmem:[#allocation5] sm:$0xf]
          %v273 = vld [vmem:[#allocation5 + $0x4] sm:$0xf]
          %v274 = vld [vmem:[#allocation5 + $0x8] sm:$0xf]
          %v275 = vld [vmem:[#allocation5 + $0xc] sm:$0xf]
          %v276 = vld [vmem:[#allocation5 + $0x10] sm:$0xf]
          %v277 = vld [vmem:[#allocation5 + $0x14] sm:$0xf]
          %v278 = vld [vmem:[#allocation5 + $0x18] sm:$0xf]
          %v279 = vld [vmem:[#allocation5 + $0x1c] sm:$0xf]
          %v280 = vld [vmem:[#allocation5 + $0x20] sm:$0xf]
          %v281 = vld [vmem:[#allocation5 + $0x24] sm:$0xf]
          %v282 = vld [vmem:[#allocation5 + $0x28] sm:$0xf]
          %v283 = vld [vmem:[#allocation5 + $0x2c] sm:$0xf]
          %v284 = vld [vmem:[#allocation5 + $0x30] sm:$0xf]
          %v285 = vld [vmem:[#allocation5 + $0x34] sm:$0xf]
          %v286 = vld [vmem:[#allocation5 + $0x38] sm:$0xf]
          %v287 = vld [vmem:[#allocation5 + $0x3c] sm:$0xf]
          %v288 = vld [vmem:[#allocation2] sm:$0xff]
          %v289 = vld [vmem:[#allocation2 + $0x8] sm:$0xff]
          %v290 = vld [vmem:[#allocation2 + $0x10] sm:$0xff]
          %v291 = vld [vmem:[#allocation2 + $0x18] sm:$0xff]
          %v292 = vld [vmem:[#allocation2 + $0x20] sm:$0xff]
          %v293 = vld [vmem:[#allocation2 + $0x28] sm:$0xff]
          %v294 = vld [vmem:[#allocation2 + $0x30] sm:$0xff]
          %v295 = vld [vmem:[#allocation2 + $0x38] sm:$0xff]
          %v296 = vld [vmem:[%s232] sm:$0x1]
          %v298 = vlaneseq
          %v299 = vshrl.u32 %v298, 7
          %v300 = vsub.s32 0, %v299
          %v301 = vrot.slane %v296, %v300
          %v319 = vunpack.c.l.b16 %v272
          %v320 = vunpack.c.l.b16 %v273
          %v321 = vunpack.c.l.b16 %v274
          %v322 = vunpack.c.l.b16 %v275
          %v323 = vunpack.c.l.b16 %v276
          %v324 = vunpack.c.l.b16 %v277
          %v325 = vunpack.c.l.b16 %v278
          %v326 = vunpack.c.l.b16 %v279
          %v327 = vunpack.c.l.b16 %v280
          %v328 = vunpack.c.l.b16 %v281
          %v329 = vunpack.c.l.b16 %v282
          %v330 = vunpack.c.l.b16 %v283
          %v331 = vunpack.c.l.b16 %v284
          %v332 = vunpack.c.l.b16 %v285
          %v333 = vunpack.c.l.b16 %v286
          %v334 = vunpack.c.l.b16 %v287
          %v335 = vpack.c.b16 %v320, %v319
          %v336 = vpack.c.b16 %v322, %v321
          %v337 = vpack.c.b16 %v324, %v323
          %v338 = vpack.c.b16 %v326, %v325
          %v339 = vpack.c.b16 %v328, %v327
          %v340 = vpack.c.b16 %v330, %v329
          %v341 = vpack.c.b16 %v332, %v331
          %v342 = vpack.c.b16 %v334, %v333
          %351 = vmatprep.subr.bf16.mxu0 0
          %352 = vmatpush1.bf16.msra.mxu0 %v288
          %353 = vmatprep.subr.bf16.mxu0 0
          %354 = vmatpush1.bf16.msra.mxu0 %v289
          %355 = vmatprep.subr.bf16.mxu0 0
          %356 = vmatpush1.bf16.msra.mxu0 %v290
          %357 = vmatprep.subr.bf16.mxu0 0
          %358 = vmatpush1.bf16.msra.mxu0 %v291
          %359 = vmatprep.subr.bf16.mxu0 0
          %360 = vmatpush1.bf16.msra.mxu0 %v292
          %361 = vmatprep.subr.bf16.mxu0 0
          %362 = vmatpush1.bf16.msra.mxu0 %v293
          %363 = vmatprep.subr.bf16.mxu0 0
          %364 = vmatpush1.bf16.msra.mxu0 %v294
          %365 = vmatprep.subr.bf16.mxu0 0
          %366 = vmatpush1.bf16.msra.mxu0 %v295
          %367 = vmatprep.subr.bf16.mxu0 0
          %368 = vmatpush1.bf16.msra.mxu0 0
          %369 = vmatprep.subr.bf16.mxu0 0
          %370 = vmatpush1.bf16.msra.mxu0 0
          %371 = vmatprep.subr.bf16.mxu0 0
          %372 = vmatpush1.bf16.msra.mxu0 0
          %373 = vmatprep.subr.bf16.mxu0 0
          %374 = vmatpush1.bf16.msra.mxu0 0
          %375 = vmatprep.subr.bf16.mxu0 0
          %376 = vmatpush1.bf16.msra.mxu0 0
          %377 = vmatprep.subr.bf16.mxu0 0
          %378 = vmatpush1.bf16.msra.mxu0 0
          %379 = vmatprep.subr.bf16.mxu0 0
          %380 = vmatpush1.bf16.msra.mxu0 0
          %381 = vmatprep.subr.bf16.mxu0 0
          %382 = vmatpush1.bf16.msra.mxu0 0
          %383 = vmatprep.mubr.bf16.mxu0 0
          %384 = vmatmul.mubr.bf16.gmra.mrb[0].mxu0 %v335
          %v385 = vpop.f32.mrb[0].mxu0
          %v386 = vadd.f32 %v301, %v385
          %v387 = vpop.f32.mrb[0].mxu0
          %v388 = vpop.f32.mrb[0].mxu0
          %v389 = vadd.f32 %v301, %v388
          %v390 = vpop.f32.mrb[0].mxu0
          %391 = vmatprep.mubr.bf16.mxu0 0
          %392 = vmatmul.mubr.bf16.gmra.mrb[0].mxu0 %v336
          %v393 = vpop.f32.mrb[0].mxu0
          %v394 = vadd.f32 %v301, %v393
          %v395 = vpop.f32.mrb[0].mxu0
          %v396 = vpop.f32.mrb[0].mxu0
          %v397 = vadd.f32 %v301, %v396
          %v398 = vpop.f32.mrb[0].mxu0
          %399 = vmatprep.mubr.bf16.mxu0 0
          %400 = vmatmul.mubr.bf16.gmra.mrb[0].mxu0 %v337
          %v401 = vpop.f32.mrb[0].mxu0
          %v402 = vadd.f32 %v301, %v401
          %v403 = vpop.f32.mrb[0].mxu0
          %v404 = vpop.f32.mrb[0].mxu0
          %v405 = vadd.f32 %v301, %v404
          %v406 = vpop.f32.mrb[0].mxu0
          %407 = vmatprep.mubr.bf16.mxu0 0
          %408 = vmatmul.mubr.bf16.gmra.mrb[0].mxu0 %v338
          %v409 = vpop.f32.mrb[0].mxu0
          %v410 = vadd.f32 %v301, %v409
          %v411 = vpop.f32.mrb[0].mxu0
          %v412 = vpop.f32.mrb[0].mxu0
          %v413 = vadd.f32 %v301, %v412
          %v414 = vpop.f32.mrb[0].mxu0
          %415 = vmatprep.mubr.bf16.mxu0 0
          %416 = vmatmul.mubr.bf16.gmra.mrb[0].mxu0 %v339
          %v417 = vpop.f32.mrb[0].mxu0
          %v418 = vadd.f32 %v301, %v417
          %v419 = vpop.f32.mrb[0].mxu0
          %v420 = vpop.f32.mrb[0].mxu0
          %v421 = vadd.f32 %v301, %v420
          %v422 = vpop.f32.mrb[0].mxu0
          %423 = vmatprep.mubr.bf16.mxu0 0
          %424 = vmatmul.mubr.bf16.gmra.mrb[0].mxu0 %v340
          %v425 = vpop.f32.mrb[0].mxu0
          %v426 = vadd.f32 %v301, %v425
          %v427 = vpop.f32.mrb[0].mxu0
          %v428 = vpop.f32.mrb[0].mxu0
          %v429 = vadd.f32 %v301, %v428
          %v430 = vpop.f32.mrb[0].mxu0
          %431 = vmatprep.mubr.bf16.mxu0 0
          %432 = vmatmul.mubr.bf16.gmra.mrb[0].mxu0 %v341
          %v433 = vpop.f32.mrb[0].mxu0
          %v434 = vadd.f32 %v301, %v433
          %v435 = vpop.f32.mrb[0].mxu0
          %v436 = vpop.f32.mrb[0].mxu0
          %v437 = vadd.f32 %v301, %v436
          %v438 = vpop.f32.mrb[0].mxu0
          %439 = vmatprep.mubr.bf16.mxu0 0
          %440 = vmatmul.mubr.bf16.gmra.mrb[0].mxu0 %v342
          %v441 = vpop.f32.mrb[0].mxu0
          %v442 = vadd.f32 %v301, %v441
          %v443 = vpop.f32.mrb[0].mxu0
          %v444 = vpop.f32.mrb[0].mxu0
          %v445 = vadd.f32 %v301, %v444
          %v446 = vpop.f32.mrb[0].mxu0
          %447 = vdwg.mxu0
          %v448 = vmax.f32 %v386, 0.0
          %v449 = vmax.f32 %v389, 0.0
          %v450 = vmax.f32 %v394, 0.0
          %v451 = vmax.f32 %v397, 0.0
          %v452 = vmax.f32 %v402, 0.0
          %v453 = vmax.f32 %v405, 0.0
          %v454 = vmax.f32 %v410, 0.0
          %v455 = vmax.f32 %v413, 0.0
          %v456 = vmax.f32 %v418, 0.0
          %v457 = vmax.f32 %v421, 0.0
          %v458 = vmax.f32 %v426, 0.0
          %v459 = vmax.f32 %v429, 0.0
          %v460 = vmax.f32 %v434, 0.0
          %v461 = vmax.f32 %v437, 0.0
          %v462 = vmax.f32 %v442, 0.0
          %v463 = vmax.f32 %v445, 0.0
          %p464 = scmp.lt.s32.totalorder %s24, 2
          // Predicated region
          $region53: #{tpu_custom_call.1} parent=51 // pred_check
            %p465 = pneg %p464
          $region54: #{tpu_custom_call.1} parent=51 // pred_check_branch
            %467 = sbr.rel (%p465) target = $region56
          $region55: #{tpu_custom_call.1} parent=51 // pred_region
            %s468 = smul.u32 %s25, 128
            %v469 = vld [vmem:[%s208] sm:$0xff]
            %v470 = vld [vmem:[%s208 + $0x8] sm:$0xff]
            %v471 = vld [vmem:[%s208 + $0x10] sm:$0xff]
            %v472 = vld [vmem:[%s208 + $0x18] sm:$0xff]
            %v473 = vld [vmem:[%s208 + $0x20] sm:$0xff]
            %v474 = vld [vmem:[%s208 + $0x28] sm:$0xff]
            %v475 = vld [vmem:[%s208 + $0x30] sm:$0xff]
            %v476 = vld [vmem:[%s208 + $0x38] sm:$0xff]
            %v477 = vld [vmem:[%s208 + $0x40] sm:$0xff]
            %v478 = vld [vmem:[%s208 + $0x48] sm:$0xff]
            %v479 = vld [vmem:[%s208 + $0x50] sm:$0xff]
            %v480 = vld [vmem:[%s208 + $0x58] sm:$0xff]
            %v481 = vld [vmem:[%s208 + $0x60] sm:$0xff]
            %v482 = vld [vmem:[%s208 + $0x68] sm:$0xff]
            %v483 = vld [vmem:[%s208 + $0x70] sm:$0xff]
            %v484 = vld [vmem:[%s208 + $0x78] sm:$0xff]
            %485 = vmatprep.subr.mxu0 0.0
            %486 = vmatpush1.msra.mxu0 %v469
            %487 = vmatprep.subr.mxu0 0.0
            %488 = vmatpush1.msra.mxu0 %v470
            %489 = vmatprep.subr.mxu0 0.0
            %490 = vmatpush1.msra.mxu0 %v471
            %491 = vmatprep.subr.mxu0 0.0
            %492 = vmatpush1.msra.mxu0 %v472
            %493 = vmatprep.subr.mxu0 0.0
            %494 = vmatpush1.msra.mxu0 %v473
            %495 = vmatprep.subr.mxu0 0.0
            %496 = vmatpush1.msra.mxu0 %v474
            %497 = vmatprep.subr.mxu0 0.0
            %498 = vmatpush1.msra.mxu0 %v475
            %499 = vmatprep.subr.mxu0 0.0
            %500 = vmatpush1.msra.mxu0 %v476
            %501 = vmatprep.subr.mxu0 0.0
            %502 = vmatpush1.msra.mxu0 %v477
            %503 = vmatprep.subr.mxu0 0.0
            %504 = vmatpush1.msra.mxu0 %v478
            %505 = vmatprep.subr.mxu0 0.0
            %506 = vmatpush1.msra.mxu0 %v479
            %507 = vmatprep.subr.mxu0 0.0
            %508 = vmatpush1.msra.mxu0 %v480
            %509 = vmatprep.subr.mxu0 0.0
            %510 = vmatpush1.msra.mxu0 %v481
            %511 = vmatprep.subr.mxu0 0.0
            %512 = vmatpush1.msra.mxu0 %v482
            %513 = vmatprep.subr.mxu0 0.0
            %514 = vmatpush1.msra.mxu0 %v483
            %515 = vmatprep.subr.mxu0 0.0
            %516 = vmatpush1.msra.mxu0 %v484
            %517 = vmatprep.subr.mxu0 0.0
            %518 = vmatpush1.msra.mxu0 0.0
            %519 = vmatprep.subr.mxu0 0.0
            %520 = vmatpush1.msra.mxu0 0.0
            %521 = vmatprep.subr.mxu0 0.0
            %522 = vmatpush1.msra.mxu0 0.0
            %523 = vmatprep.subr.mxu0 0.0
            %524 = vmatpush1.msra.mxu0 0.0
            %525 = vmatprep.subr.mxu0 0.0
            %526 = vmatpush1.msra.mxu0 0.0
            %527 = vmatprep.subr.mxu0 0.0
            %528 = vmatpush1.msra.mxu0 0.0
            %529 = vmatprep.subr.mxu0 0.0
            %530 = vmatpush1.msra.mxu0 0.0
            %531 = vmatprep.subr.mxu0 0.0
            %532 = vmatpush1.msra.mxu0 0.0
            %533 = vmatprep.subr.mxu0 0.0
            %534 = vmatpush1.msra.mxu0 0.0
            %535 = vmatprep.subr.mxu0 0.0
            %536 = vmatpush1.msra.mxu0 0.0
            %537 = vmatprep.subr.mxu0 0.0
            %538 = vmatpush1.msra.mxu0 0.0
            %539 = vmatprep.subr.mxu0 0.0
            %540 = vmatpush1.msra.mxu0 0.0
            %541 = vmatprep.subr.mxu0 0.0
            %542 = vmatpush1.msra.mxu0 0.0
            %543 = vmatprep.subr.mxu0 0.0
            %544 = vmatpush1.msra.mxu0 0.0
            %545 = vmatprep.subr.mxu0 0.0
            %546 = vmatpush1.msra.mxu0 0.0
            %547 = vmatprep.subr.mxu0 0.0
            %548 = vmatpush1.msra.mxu0 0.0
            %549 = vmatprep.mubr.f32.mxu0 0.0
            %550 = vmatmul.mubr.f32.gmra.mrb[0].mxu0 %v448
            %v551 = vpop.f32.mrb[0].mxu0
            %v552 = vadd.f32 0.0, %v551
            %v553 = vpop.f32.mrb[0].mxu0
            %554 = vmatprep.mubr.f32.mxu0 0.0
            %555 = vmatmul.mubr.f32.gmra.mrb[0].mxu0 %v449
            %v556 = vpop.f32.mrb[0].mxu0
            %v557 = vadd.f32 0.0, %v556
            %v558 = vpop.f32.mrb[0].mxu0
            %559 = vmatprep.mubr.f32.mxu0 0.0
            %560 = vmatmul.mubr.f32.gmra.mrb[0].mxu0 %v450
            %v561 = vpop.f32.mrb[0].mxu0
            %v562 = vadd.f32 0.0, %v561
            %v563 = vpop.f32.mrb[0].mxu0
            %564 = vmatprep.mubr.f32.mxu0 0.0
            %565 = vmatmul.mubr.f32.gmra.mrb[0].mxu0 %v451
            %v566 = vpop.f32.mrb[0].mxu0
            %v567 = vadd.f32 0.0, %v566
            %v568 = vpop.f32.mrb[0].mxu0
            %569 = vmatprep.mubr.f32.mxu0 0.0
            %570 = vmatmul.mubr.f32.gmra.mrb[0].mxu0 %v452
            %v571 = vpop.f32.mrb[0].mxu0
            %v572 = vadd.f32 0.0, %v571
            %v573 = vpop.f32.mrb[0].mxu0
            %574 = vmatprep.mubr.f32.mxu0 0.0
            %575 = vmatmul.mubr.f32.gmra.mrb[0].mxu0 %v453
            %v576 = vpop.f32.mrb[0].mxu0
            %v577 = vadd.f32 0.0, %v576
            %v578 = vpop.f32.mrb[0].mxu0
            %579 = vmatprep.mubr.f32.mxu0 0.0
            %580 = vmatmul.mubr.f32.gmra.mrb[0].mxu0 %v454
            %v581 = vpop.f32.mrb[0].mxu0
            %v582 = vadd.f32 0.0, %v581
            %v583 = vpop.f32.mrb[0].mxu0
            %584 = vmatprep.mubr.f32.mxu0 0.0
            %585 = vmatmul.mubr.f32.gmra.mrb[0].mxu0 %v455
            %v586 = vpop.f32.mrb[0].mxu0
            %v587 = vadd.f32 0.0, %v586
            %v588 = vpop.f32.mrb[0].mxu0
            %589 = vmatprep.mubr.f32.mxu0 0.0
            %590 = vmatmul.mubr.f32.gmra.mrb[0].mxu0 %v456
            %v591 = vpop.f32.mrb[0].mxu0
            %v592 = vadd.f32 0.0, %v591
            %v593 = vpop.f32.mrb[0].mxu0
            %594 = vmatprep.mubr.f32.mxu0 0.0
            %595 = vmatmul.mubr.f32.gmra.mrb[0].mxu0 %v457
            %v596 = vpop.f32.mrb[0].mxu0
            %v597 = vadd.f32 0.0, %v596
            %v598 = vpop.f32.mrb[0].mxu0
            %599 = vmatprep.mubr.f32.mxu0 0.0
            %600 = vmatmul.mubr.f32.gmra.mrb[0].mxu0 %v458
            %v601 = vpop.f32.mrb[0].mxu0
            %v602 = vadd.f32 0.0, %v601
            %v603 = vpop.f32.mrb[0].mxu0
            %604 = vmatprep.mubr.f32.mxu0 0.0
            %605 = vmatmul.mubr.f32.gmra.mrb[0].mxu0 %v459
            %v606 = vpop.f32.mrb[0].mxu0
            %v607 = vadd.f32 0.0, %v606
            %v608 = vpop.f32.mrb[0].mxu0
            %609 = vmatprep.mubr.f32.mxu0 0.0
            %610 = vmatmul.mubr.f32.gmra.mrb[0].mxu0 %v460
            %v611 = vpop.f32.mrb[0].mxu0
            %v612 = vadd.f32 0.0, %v611
            %v613 = vpop.f32.mrb[0].mxu0
            %614 = vmatprep.mubr.f32.mxu0 0.0
            %615 = vmatmul.mubr.f32.gmra.mrb[0].mxu0 %v461
            %v616 = vpop.f32.mrb[0].mxu0
            %v617 = vadd.f32 0.0, %v616
            %v618 = vpop.f32.mrb[0].mxu0
            %619 = vmatprep.mubr.f32.mxu0 0.0
            %620 = vmatmul.mubr.f32.gmra.mrb[0].mxu0 %v462
            %v621 = vpop.f32.mrb[0].mxu0
            %v622 = vadd.f32 0.0, %v621
            %v623 = vpop.f32.mrb[0].mxu0
            %624 = vmatprep.mubr.f32.mxu0 0.0
            %625 = vmatmul.mubr.f32.gmra.mrb[0].mxu0 %v463
            %v626 = vpop.f32.mrb[0].mxu0
            %v627 = vadd.f32 0.0, %v626
            %v628 = vpop.f32.mrb[0].mxu0
            %629 = vdwg.mxu0
            %v630 = vpack.c.bf16 %v557, %v552
            %v631 = vpack.c.bf16 %v567, %v562
            %v632 = vpack.c.bf16 %v577, %v572
            %v633 = vpack.c.bf16 %v587, %v582
            %v634 = vpack.c.bf16 %v597, %v592
            %v635 = vpack.c.bf16 %v607, %v602
            %v636 = vpack.c.bf16 %v617, %v612
            %v637 = vpack.c.bf16 %v627, %v622
            %s638 = sshra.s32 %s468, 4
            %s639 = sand.u32 %s468, 15
            %s640 = smul.addr %s638, 8
            %s641 = scalar_lea.vmem [#allocation3], %s640
            %642 = vst [vmem:[%s641] sm:$0xff] %v630
            %643 = vst [vmem:[%s641 + $0x8] sm:$0xff] %v631
            %644 = vst [vmem:[%s641 + $0x10] sm:$0xff] %v632
            %645 = vst [vmem:[%s641 + $0x18] sm:$0xff] %v633
            %646 = vst [vmem:[%s641 + $0x20] sm:$0xff] %v634
            %647 = vst [vmem:[%s641 + $0x28] sm:$0xff] %v635
            %648 = vst [vmem:[%s641 + $0x30] sm:$0xff] %v636
            %649 = vst [vmem:[%s641 + $0x38] sm:$0xff] %v637
          $region56: #{tpu_custom_call.1} parent=51 // pred_fallthru
            _
          %p650 = scmp.eq.s32.totalorder %s24, 2
          // Predicated region
          $region57: #{tpu_custom_call.1} parent=51 // pred_check
            %p651 = pneg %p650
          $region58: #{tpu_custom_call.1} parent=51 // pred_check_branch
            %653 = sbr.rel (%p651) target = $region60
          $region59: #{tpu_custom_call.1} parent=51 // pred_region
            %654 = vst [vmem:[#allocation10] sm:$0xff] %v448
            %655 = vst [vmem:[#allocation10 + $0x8] sm:$0xff] %v449
            %656 = vst [vmem:[#allocation10 + $0x10] sm:$0xff] %v450
            %657 = vst [vmem:[#allocation10 + $0x18] sm:$0xff] %v451
            %658 = vst [vmem:[#allocation10 + $0x20] sm:$0xff] %v452
            %659 = vst [vmem:[#allocation10 + $0x28] sm:$0xff] %v453
            %660 = vst [vmem:[#allocation10 + $0x30] sm:$0xff] %v454
            %661 = vst [vmem:[#allocation10 + $0x38] sm:$0xff] %v455
            %662 = vst [vmem:[#allocation10 + $0x40] sm:$0xff] %v456
            %663 = vst [vmem:[#allocation10 + $0x48] sm:$0xff] %v457
            %664 = vst [vmem:[#allocation10 + $0x50] sm:$0xff] %v458
            %665 = vst [vmem:[#allocation10 + $0x58] sm:$0xff] %v459
            %666 = vst [vmem:[#allocation10 + $0x60] sm:$0xff] %v460
            %667 = vst [vmem:[#allocation10 + $0x68] sm:$0xff] %v461
            %668 = vst [vmem:[#allocation10 + $0x70] sm:$0xff] %v462
            %669 = vst [vmem:[#allocation10 + $0x78] sm:$0xff] %v463
          $region60: #{tpu_custom_call.1} parent=51 // pred_fallthru
            _
        $region52: #{tpu_custom_call.1} parent=31 // pred_fallthru
          _
        %p670 = scmp.eq.s32.totalorder %s267, 1
        // Predicated region
        $region61: #{tpu_custom_call.1} parent=31 // pred_check
          %p671 = pneg %p670
        $region62: #{tpu_custom_call.1} parent=31 // pred_check_branch
          %673 = sbr.rel (%p671) target = $region64
        $region63: #{tpu_custom_call.1} parent=31 // pred_region
          %v674 = vld [vmem:[#allocation5] sm:$0xf]
          %v675 = vld [vmem:[#allocation5 + $0x4] sm:$0xf]
          %v676 = vld [vmem:[#allocation5 + $0x8] sm:$0xf]
          %v677 = vld [vmem:[#allocation5 + $0xc] sm:$0xf]
          %v678 = vld [vmem:[#allocation5 + $0x10] sm:$0xf]
          %v679 = vld [vmem:[#allocation5 + $0x14] sm:$0xf]
          %v680 = vld [vmem:[#allocation5 + $0x18] sm:$0xf]
          %v681 = vld [vmem:[#allocation5 + $0x1c] sm:$0xf]
          %v682 = vld [vmem:[#allocation5 + $0x20] sm:$0xf]
          %v683 = vld [vmem:[#allocation5 + $0x24] sm:$0xf]
          %v684 = vld [vmem:[#allocation5 + $0x28] sm:$0xf]
          %v685 = vld [vmem:[#allocation5 + $0x2c] sm:$0xf]
          %v686 = vld [vmem:[#allocation5 + $0x30] sm:$0xf]
          %v687 = vld [vmem:[#allocation5 + $0x34] sm:$0xf]
          %v688 = vld [vmem:[#allocation5 + $0x38] sm:$0xf]
          %v689 = vld [vmem:[#allocation5 + $0x3c] sm:$0xf]
          %v690 = vld [vmem:[#allocation3] sm:$0xff]
          %v691 = vld [vmem:[#allocation3 + $0x8] sm:$0xff]
          %v692 = vld [vmem:[#allocation3 + $0x10] sm:$0xff]
          %v693 = vld [vmem:[#allocation3 + $0x18] sm:$0xff]
          %v694 = vld [vmem:[#allocation3 + $0x20] sm:$0xff]
          %v695 = vld [vmem:[#allocation3 + $0x28] sm:$0xff]
          %v696 = vld [vmem:[#allocation3 + $0x30] sm:$0xff]
          %v697 = vld [vmem:[#allocation3 + $0x38] sm:$0xff]
          %v698 = vld [vmem:[%s232] sm:$0x1]
          %v700 = vlaneseq
          %v701 = vshrl.u32 %v700, 7
          %v702 = vsub.s32 0, %v701
          %v703 = vrot.slane %v698, %v702
          %v721 = vunpack.c.l.b16 %v674
          %v722 = vunpack.c.l.b16 %v675
          %v723 = vunpack.c.l.b16 %v676
          %v724 = vunpack.c.l.b16 %v677
          %v725 = vunpack.c.l.b16 %v678
          %v726 = vunpack.c.l.b16 %v679
          %v727 = vunpack.c.l.b16 %v680
          %v728 = vunpack.c.l.b16 %v681
          %v729 = vunpack.c.l.b16 %v682
          %v730 = vunpack.c.l.b16 %v683
          %v731 = vunpack.c.l.b16 %v684
          %v732 = vunpack.c.l.b16 %v685
          %v733 = vunpack.c.l.b16 %v686
          %v734 = vunpack.c.l.b16 %v687
          %v735 = vunpack.c.l.b16 %v688
          %v736 = vunpack.c.l.b16 %v689
          %v737 = vpack.c.b16 %v722, %v721
          %v738 = vpack.c.b16 %v724, %v723
          %v739 = vpack.c.b16 %v726, %v725
          %v740 = vpack.c.b16 %v728, %v727
          %v741 = vpack.c.b16 %v730, %v729
          %v742 = vpack.c.b16 %v732, %v731
          %v743 = vpack.c.b16 %v734, %v733
          %v744 = vpack.c.b16 %v736, %v735
          %753 = vmatprep.subr.bf16.mxu0 0
          %754 = vmatpush1.bf16.msra.mxu0 %v690
          %755 = vmatprep.subr.bf16.mxu0 0
          %756 = vmatpush1.bf16.msra.mxu0 %v691
          %757 = vmatprep.subr.bf16.mxu0 0
          %758 = vmatpush1.bf16.msra.mxu0 %v692
          %759 = vmatprep.subr.bf16.mxu0 0
          %760 = vmatpush1.bf16.msra.mxu0 %v693
          %761 = vmatprep.subr.bf16.mxu0 0
          %762 = vmatpush1.bf16.msra.mxu0 %v694
          %763 = vmatprep.subr.bf16.mxu0 0
          %764 = vmatpush1.bf16.msra.mxu0 %v695
          %765 = vmatprep.subr.bf16.mxu0 0
          %766 = vmatpush1.bf16.msra.mxu0 %v696
          %767 = vmatprep.subr.bf16.mxu0 0
          %768 = vmatpush1.bf16.msra.mxu0 %v697
          %769 = vmatprep.subr.bf16.mxu0 0
          %770 = vmatpush1.bf16.msra.mxu0 0
          %771 = vmatprep.subr.bf16.mxu0 0
          %772 = vmatpush1.bf16.msra.mxu0 0
          %773 = vmatprep.subr.bf16.mxu0 0
          %774 = vmatpush1.bf16.msra.mxu0 0
          %775 = vmatprep.subr.bf16.mxu0 0
          %776 = vmatpush1.bf16.msra.mxu0 0
          %777 = vmatprep.subr.bf16.mxu0 0
          %778 = vmatpush1.bf16.msra.mxu0 0
          %779 = vmatprep.subr.bf16.mxu0 0
          %780 = vmatpush1.bf16.msra.mxu0 0
          %781 = vmatprep.subr.bf16.mxu0 0
          %782 = vmatpush1.bf16.msra.mxu0 0
          %783 = vmatprep.subr.bf16.mxu0 0
          %784 = vmatpush1.bf16.msra.mxu0 0
          %785 = vmatprep.mubr.bf16.mxu0 0
          %786 = vmatmul.mubr.bf16.gmra.mrb[0].mxu0 %v737
          %v787 = vpop.f32.mrb[0].mxu0
          %v788 = vadd.f32 %v703, %v787
          %v789 = vpop.f32.mrb[0].mxu0
          %v790 = vpop.f32.mrb[0].mxu0
          %v791 = vadd.f32 %v703, %v790
          %v792 = vpop.f32.mrb[0].mxu0
          %793 = vmatprep.mubr.bf16.mxu0 0
          %794 = vmatmul.mubr.bf16.gmra.mrb[0].mxu0 %v738
          %v795 = vpop.f32.mrb[0].mxu0
          %v796 = vadd.f32 %v703, %v795
          %v797 = vpop.f32.mrb[0].mxu0
          %v798 = vpop.f32.mrb[0].mxu0
          %v799 = vadd.f32 %v703, %v798
          %v800 = vpop.f32.mrb[0].mxu0
          %801 = vmatprep.mubr.bf16.mxu0 0
          %802 = vmatmul.mubr.bf16.gmra.mrb[0].mxu0 %v739
          %v803 = vpop.f32.mrb[0].mxu0
          %v804 = vadd.f32 %v703, %v803
          %v805 = vpop.f32.mrb[0].mxu0
          %v806 = vpop.f32.mrb[0].mxu0
          %v807 = vadd.f32 %v703, %v806
          %v808 = vpop.f32.mrb[0].mxu0
          %809 = vmatprep.mubr.bf16.mxu0 0
          %810 = vmatmul.mubr.bf16.gmra.mrb[0].mxu0 %v740
          %v811 = vpop.f32.mrb[0].mxu0
          %v812 = vadd.f32 %v703, %v811
          %v813 = vpop.f32.mrb[0].mxu0
          %v814 = vpop.f32.mrb[0].mxu0
          %v815 = vadd.f32 %v703, %v814
          %v816 = vpop.f32.mrb[0].mxu0
          %817 = vmatprep.mubr.bf16.mxu0 0
          %818 = vmatmul.mubr.bf16.gmra.mrb[0].mxu0 %v741
          %v819 = vpop.f32.mrb[0].mxu0
          %v820 = vadd.f32 %v703, %v819
          %v821 = vpop.f32.mrb[0].mxu0
          %v822 = vpop.f32.mrb[0].mxu0
          %v823 = vadd.f32 %v703, %v822
          %v824 = vpop.f32.mrb[0].mxu0
          %825 = vmatprep.mubr.bf16.mxu0 0
          %826 = vmatmul.mubr.bf16.gmra.mrb[0].mxu0 %v742
          %v827 = vpop.f32.mrb[0].mxu0
          %v828 = vadd.f32 %v703, %v827
          %v829 = vpop.f32.mrb[0].mxu0
          %v830 = vpop.f32.mrb[0].mxu0
          %v831 = vadd.f32 %v703, %v830
          %v832 = vpop.f32.mrb[0].mxu0
          %833 = vmatprep.mubr.bf16.mxu0 0
          %834 = vmatmul.mubr.bf16.gmra.mrb[0].mxu0 %v743
          %v835 = vpop.f32.mrb[0].mxu0
          %v836 = vadd.f32 %v703, %v835
          %v837 = vpop.f32.mrb[0].mxu0
          %v838 = vpop.f32.mrb[0].mxu0
          %v839 = vadd.f32 %v703, %v838
          %v840 = vpop.f32.mrb[0].mxu0
          %841 = vmatprep.mubr.bf16.mxu0 0
          %842 = vmatmul.mubr.bf16.gmra.mrb[0].mxu0 %v744
          %v843 = vpop.f32.mrb[0].mxu0
          %v844 = vadd.f32 %v703, %v843
          %v845 = vpop.f32.mrb[0].mxu0
          %v846 = vpop.f32.mrb[0].mxu0
          %v847 = vadd.f32 %v703, %v846
          %v848 = vpop.f32.mrb[0].mxu0
          %849 = vdwg.mxu0
          %v850 = vmax.f32 %v788, 0.0
          %v851 = vmax.f32 %v791, 0.0
          %v852 = vmax.f32 %v796, 0.0
          %v853 = vmax.f32 %v799, 0.0
          %v854 = vmax.f32 %v804, 0.0
          %v855 = vmax.f32 %v807, 0.0
          %v856 = vmax.f32 %v812, 0.0
          %v857 = vmax.f32 %v815, 0.0
          %v858 = vmax.f32 %v820, 0.0
          %v859 = vmax.f32 %v823, 0.0
          %v860 = vmax.f32 %v828, 0.0
          %v861 = vmax.f32 %v831, 0.0
          %v862 = vmax.f32 %v836, 0.0
          %v863 = vmax.f32 %v839, 0.0
          %v864 = vmax.f32 %v844, 0.0
          %v865 = vmax.f32 %v847, 0.0
          %p866 = scmp.lt.s32.totalorder %s24, 2
          // Predicated region
          $region65: #{tpu_custom_call.1} parent=63 // pred_check
            %p867 = pneg %p866
          $region66: #{tpu_custom_call.1} parent=63 // pred_check_branch
            %869 = sbr.rel (%p867) target = $region68
          $region67: #{tpu_custom_call.1} parent=63 // pred_region
            %s870 = smul.u32 %s25, 128
            %v871 = vld [vmem:[%s208] sm:$0xff]
            %v872 = vld [vmem:[%s208 + $0x8] sm:$0xff]
            %v873 = vld [vmem:[%s208 + $0x10] sm:$0xff]
            %v874 = vld [vmem:[%s208 + $0x18] sm:$0xff]
            %v875 = vld [vmem:[%s208 + $0x20] sm:$0xff]
            %v876 = vld [vmem:[%s208 + $0x28] sm:$0xff]
            %v877 = vld [vmem:[%s208 + $0x30] sm:$0xff]
            %v878 = vld [vmem:[%s208 + $0x38] sm:$0xff]
            %v879 = vld [vmem:[%s208 + $0x40] sm:$0xff]
            %v880 = vld [vmem:[%s208 + $0x48] sm:$0xff]
            %v881 = vld [vmem:[%s208 + $0x50] sm:$0xff]
            %v882 = vld [vmem:[%s208 + $0x58] sm:$0xff]
            %v883 = vld [vmem:[%s208 + $0x60] sm:$0xff]
            %v884 = vld [vmem:[%s208 + $0x68] sm:$0xff]
            %v885 = vld [vmem:[%s208 + $0x70] sm:$0xff]
            %v886 = vld [vmem:[%s208 + $0x78] sm:$0xff]
            %887 = vmatprep.subr.mxu0 0.0
            %888 = vmatpush1.msra.mxu0 %v871
            %889 = vmatprep.subr.mxu0 0.0
            %890 = vmatpush1.msra.mxu0 %v872
            %891 = vmatprep.subr.mxu0 0.0
            %892 = vmatpush1.msra.mxu0 %v873
            %893 = vmatprep.subr.mxu0 0.0
            %894 = vmatpush1.msra.mxu0 %v874
            %895 = vmatprep.subr.mxu0 0.0
            %896 = vmatpush1.msra.mxu0 %v875
            %897 = vmatprep.subr.mxu0 0.0
            %898 = vmatpush1.msra.mxu0 %v876
            %899 = vmatprep.subr.mxu0 0.0
            %900 = vmatpush1.msra.mxu0 %v877
            %901 = vmatprep.subr.mxu0 0.0
            %902 = vmatpush1.msra.mxu0 %v878
            %903 = vmatprep.subr.mxu0 0.0
            %904 = vmatpush1.msra.mxu0 %v879
            %905 = vmatprep.subr.mxu0 0.0
            %906 = vmatpush1.msra.mxu0 %v880
            %907 = vmatprep.subr.mxu0 0.0
            %908 = vmatpush1.msra.mxu0 %v881
            %909 = vmatprep.subr.mxu0 0.0
            %910 = vmatpush1.msra.mxu0 %v882
            %911 = vmatprep.subr.mxu0 0.0
            %912 = vmatpush1.msra.mxu0 %v883
            %913 = vmatprep.subr.mxu0 0.0
            %914 = vmatpush1.msra.mxu0 %v884
            %915 = vmatprep.subr.mxu0 0.0
            %916 = vmatpush1.msra.mxu0 %v885
            %917 = vmatprep.subr.mxu0 0.0
            %918 = vmatpush1.msra.mxu0 %v886
            %919 = vmatprep.subr.mxu0 0.0
            %920 = vmatpush1.msra.mxu0 0.0
            %921 = vmatprep.subr.mxu0 0.0
            %922 = vmatpush1.msra.mxu0 0.0
            %923 = vmatprep.subr.mxu0 0.0
            %924 = vmatpush1.msra.mxu0 0.0
            %925 = vmatprep.subr.mxu0 0.0
            %926 = vmatpush1.msra.mxu0 0.0
            %927 = vmatprep.subr.mxu0 0.0
            %928 = vmatpush1.msra.mxu0 0.0
            %929 = vmatprep.subr.mxu0 0.0
            %930 = vmatpush1.msra.mxu0 0.0
            %931 = vmatprep.subr.mxu0 0.0
            %932 = vmatpush1.msra.mxu0 0.0
            %933 = vmatprep.subr.mxu0 0.0
            %934 = vmatpush1.msra.mxu0 0.0
            %935 = vmatprep.subr.mxu0 0.0
            %936 = vmatpush1.msra.mxu0 0.0
            %937 = vmatprep.subr.mxu0 0.0
            %938 = vmatpush1.msra.mxu0 0.0
            %939 = vmatprep.subr.mxu0 0.0
            %940 = vmatpush1.msra.mxu0 0.0
            %941 = vmatprep.subr.mxu0 0.0
            %942 = vmatpush1.msra.mxu0 0.0
            %943 = vmatprep.subr.mxu0 0.0
            %944 = vmatpush1.msra.mxu0 0.0
            %945 = vmatprep.subr.mxu0 0.0
            %946 = vmatpush1.msra.mxu0 0.0
            %947 = vmatprep.subr.mxu0 0.0
            %948 = vmatpush1.msra.mxu0 0.0
            %949 = vmatprep.subr.mxu0 0.0
            %950 = vmatpush1.msra.mxu0 0.0
            %951 = vmatprep.mubr.f32.mxu0 0.0
            %952 = vmatmul.mubr.f32.gmra.mrb[0].mxu0 %v850
            %v953 = vpop.f32.mrb[0].mxu0
            %v954 = vadd.f32 0.0, %v953
            %v955 = vpop.f32.mrb[0].mxu0
            %956 = vmatprep.mubr.f32.mxu0 0.0
            %957 = vmatmul.mubr.f32.gmra.mrb[0].mxu0 %v851
            %v958 = vpop.f32.mrb[0].mxu0
            %v959 = vadd.f32 0.0, %v958
            %v960 = vpop.f32.mrb[0].mxu0
            %961 = vmatprep.mubr.f32.mxu0 0.0
            %962 = vmatmul.mubr.f32.gmra.mrb[0].mxu0 %v852
            %v963 = vpop.f32.mrb[0].mxu0
            %v964 = vadd.f32 0.0, %v963
            %v965 = vpop.f32.mrb[0].mxu0
            %966 = vmatprep.mubr.f32.mxu0 0.0
            %967 = vmatmul.mubr.f32.gmra.mrb[0].mxu0 %v853
            %v968 = vpop.f32.mrb[0].mxu0
            %v969 = vadd.f32 0.0, %v968
            %v970 = vpop.f32.mrb[0].mxu0
            %971 = vmatprep.mubr.f32.mxu0 0.0
            %972 = vmatmul.mubr.f32.gmra.mrb[0].mxu0 %v854
            %v973 = vpop.f32.mrb[0].mxu0
            %v974 = vadd.f32 0.0, %v973
            %v975 = vpop.f32.mrb[0].mxu0
            %976 = vmatprep.mubr.f32.mxu0 0.0
            %977 = vmatmul.mubr.f32.gmra.mrb[0].mxu0 %v855
            %v978 = vpop.f32.mrb[0].mxu0
            %v979 = vadd.f32 0.0, %v978
            %v980 = vpop.f32.mrb[0].mxu0
            %981 = vmatprep.mubr.f32.mxu0 0.0
            %982 = vmatmul.mubr.f32.gmra.mrb[0].mxu0 %v856
            %v983 = vpop.f32.mrb[0].mxu0
            %v984 = vadd.f32 0.0, %v983
            %v985 = vpop.f32.mrb[0].mxu0
            %986 = vmatprep.mubr.f32.mxu0 0.0
            %987 = vmatmul.mubr.f32.gmra.mrb[0].mxu0 %v857
            %v988 = vpop.f32.mrb[0].mxu0
            %v989 = vadd.f32 0.0, %v988
            %v990 = vpop.f32.mrb[0].mxu0
            %991 = vmatprep.mubr.f32.mxu0 0.0
            %992 = vmatmul.mubr.f32.gmra.mrb[0].mxu0 %v858
            %v993 = vpop.f32.mrb[0].mxu0
            %v994 = vadd.f32 0.0, %v993
            %v995 = vpop.f32.mrb[0].mxu0
            %996 = vmatprep.mubr.f32.mxu0 0.0
            %997 = vmatmul.mubr.f32.gmra.mrb[0].mxu0 %v859
            %v998 = vpop.f32.mrb[0].mxu0
            %v999 = vadd.f32 0.0, %v998
            %v1000 = vpop.f32.mrb[0].mxu0
            %1001 = vmatprep.mubr.f32.mxu0 0.0
            %1002 = vmatmul.mubr.f32.gmra.mrb[0].mxu0 %v860
            %v1003 = vpop.f32.mrb[0].mxu0
            %v1004 = vadd.f32 0.0, %v1003
            %v1005 = vpop.f32.mrb[0].mxu0
            %1006 = vmatprep.mubr.f32.mxu0 0.0
            %1007 = vmatmul.mubr.f32.gmra.mrb[0].mxu0 %v861
            %v1008 = vpop.f32.mrb[0].mxu0
            %v1009 = vadd.f32 0.0, %v1008
            %v1010 = vpop.f32.mrb[0].mxu0
            %1011 = vmatprep.mubr.f32.mxu0 0.0
            %1012 = vmatmul.mubr.f32.gmra.mrb[0].mxu0 %v862
            %v1013 = vpop.f32.mrb[0].mxu0
            %v1014 = vadd.f32 0.0, %v1013
            %v1015 = vpop.f32.mrb[0].mxu0
            %1016 = vmatprep.mubr.f32.mxu0 0.0
            %1017 = vmatmul.mubr.f32.gmra.mrb[0].mxu0 %v863
            %v1018 = vpop.f32.mrb[0].mxu0
            %v1019 = vadd.f32 0.0, %v1018
            %v1020 = vpop.f32.mrb[0].mxu0
            %1021 = vmatprep.mubr.f32.mxu0 0.0
            %1022 = vmatmul.mubr.f32.gmra.mrb[0].mxu0 %v864
            %v1023 = vpop.f32.mrb[0].mxu0
            %v1024 = vadd.f32 0.0, %v1023
            %v1025 = vpop.f32.mrb[0].mxu0
            %1026 = vmatprep.mubr.f32.mxu0 0.0
            %1027 = vmatmul.mubr.f32.gmra.mrb[0].mxu0 %v865
            %v1028 = vpop.f32.mrb[0].mxu0
            %v1029 = vadd.f32 0.0, %v1028
            %v1030 = vpop.f32.mrb[0].mxu0
            %1031 = vdwg.mxu0
            %v1032 = vpack.c.bf16 %v959, %v954
            %v1033 = vpack.c.bf16 %v969, %v964
            %v1034 = vpack.c.bf16 %v979, %v974
            %v1035 = vpack.c.bf16 %v989, %v984
            %v1036 = vpack.c.bf16 %v999, %v994
            %v1037 = vpack.c.bf16 %v1009, %v1004
            %v1038 = vpack.c.bf16 %v1019, %v1014
            %v1039 = vpack.c.bf16 %v1029, %v1024
            %s1040 = sshra.s32 %s870, 4
            %s1041 = sand.u32 %s870, 15
            %s1042 = smul.addr %s1040, 8
            %s1043 = scalar_lea.vmem [#allocation2], %s1042
            %1044 = vst [vmem:[%s1043] sm:$0xff] %v1032
            %1045 = vst [vmem:[%s1043 + $0x8] sm:$0xff] %v1033
            %1046 = vst [vmem:[%s1043 + $0x10] sm:$0xff] %v1034
            %1047 = vst [vmem:[%s1043 + $0x18] sm:$0xff] %v1035
            %1048 = vst [vmem:[%s1043 + $0x20] sm:$0xff] %v1036
            %1049 = vst [vmem:[%s1043 + $0x28] sm:$0xff] %v1037
            %1050 = vst [vmem:[%s1043 + $0x30] sm:$0xff] %v1038
            %1051 = vst [vmem:[%s1043 + $0x38] sm:$0xff] %v1039
          $region68: #{tpu_custom_call.1} parent=63 // pred_fallthru
            _
          %p1052 = scmp.eq.s32.totalorder %s24, 2
          // Predicated region
          $region69: #{tpu_custom_call.1} parent=63 // pred_check
            %p1053 = pneg %p1052
          $region70: #{tpu_custom_call.1} parent=63 // pred_check_branch
            %1055 = sbr.rel (%p1053) target = $region72
          $region71: #{tpu_custom_call.1} parent=63 // pred_region
            %1056 = vst [vmem:[#allocation10] sm:$0xff] %v850
            %1057 = vst [vmem:[#allocation10 + $0x8] sm:$0xff] %v851
            %1058 = vst [vmem:[#allocation10 + $0x10] sm:$0xff] %v852
            %1059 = vst [vmem:[#allocation10 + $0x18] sm:$0xff] %v853
            %1060 = vst [vmem:[#allocation10 + $0x20] sm:$0xff] %v854
            %1061 = vst [vmem:[#allocation10 + $0x28] sm:$0xff] %v855
            %1062 = vst [vmem:[#allocation10 + $0x30] sm:$0xff] %v856
            %1063 = vst [vmem:[#allocation10 + $0x38] sm:$0xff] %v857
            %1064 = vst [vmem:[#allocation10 + $0x40] sm:$0xff] %v858
            %1065 = vst [vmem:[#allocation10 + $0x48] sm:$0xff] %v859
            %1066 = vst [vmem:[#allocation10 + $0x50] sm:$0xff] %v860
            %1067 = vst [vmem:[#allocation10 + $0x58] sm:$0xff] %v861
            %1068 = vst [vmem:[#allocation10 + $0x60] sm:$0xff] %v862
            %1069 = vst [vmem:[#allocation10 + $0x68] sm:$0xff] %v863
            %1070 = vst [vmem:[#allocation10 + $0x70] sm:$0xff] %v864
            %1071 = vst [vmem:[#allocation10 + $0x78] sm:$0xff] %v865
          $region72: #{tpu_custom_call.1} parent=63 // pred_fallthru
            _
        $region64: #{tpu_custom_call.1} parent=31 // pred_fallthru
          _
        // Predicated region
        $region73: #{tpu_custom_call.1} parent=31 // pred_check
          %p1072 = pneg %p128
        $region74: #{tpu_custom_call.1} parent=31 // pred_check_branch
          %1074 = sbr.rel (%p1072) target = $region76
        $region75: #{tpu_custom_call.1} parent=31 // pred_region
          %s1075 = smul.u32 16, %s25
          %s1077 = ssub.s32 2048, 2048
          %1078 = vsyncadd [#allocation7], %s1077
          %s1079 = smul.addr %s1075, 128
          %s1080 = scalar_lea.hbm %s4, %s1079
          %s1081 = sshll.u32 [#allocation10], 4
          %s1082 = int_to_ptr.vmem [resolvable:$true] %s1081
          %1087 = dma.vmem_to_hbm [thread:$0]  %s1082, 2048, %s1080, [#allocation7], 128, 128, 8
        $region76: #{tpu_custom_call.1} parent=31 // pred_fallthru
          _
        // Predicated region
        $region77: #{tpu_custom_call.1} parent=31 // pred_check
          %p1088 = pneg %p128
        $region78: #{tpu_custom_call.1} parent=31 // pred_check_branch
          %1090 = sbr.rel (%p1088) target = $region80
        $region79: #{tpu_custom_call.1} parent=31 // pred_region
          %1091 = dma.done [#allocation7], 2048
        $region80: #{tpu_custom_call.1} parent=31 // pred_fallthru
          _
      $region32: #{tpu_custom_call.1} parent=5 // pred_fallthru
        _
      %p1092 = scmp.le.s32.totalorder 2, %s15
      // Predicated region
      $region81: #{tpu_custom_call.1} parent=5 // pred_check
        %p1093 = pneg %p1092
      $region82: #{tpu_custom_call.1} parent=5 // pred_check_branch
        %1095 = sbr.rel (%p1093) target = $region84
      $region83: #{tpu_custom_call.1} parent=5 // pred_region
        %s1096 = ssub.s32 %s15, 2
      $region84: #{tpu_custom_call.1} parent=5 // pred_fallthru
        _
    $region6: #{tpu_custom_call.1} parent=1 // loop_footer
      %s19 = sadd.s32 1, %s15
    $region7: #{tpu_custom_call.1} parent=1 // loop_footer_branch
      %14 = sbr.rel target = $region3
    $region8: #{tpu_custom_call.1} parent=1 // loop_exit
      _
    %1097 = vsyncpa [#allocation6], 1
    %s1098 = scalar_lea.sflag [#allocation6], 1
    %1099 = vsyncpa %s1098, 1
    %1100 = vsyncpa [#allocation9], 1
    %s1101 = scalar_lea.sflag [#allocation9], 1
    %1102 = vsyncpa %s1101, 1
    %1103 = vsyncpa [#allocation7], 1
    %s1104 = scalar_lea.sflag [#allocation7], 1
    %1105 = vsyncpa %s1104, 1
  %1106 = vsyncmov [#allocation4]
  %s1107 = vpop.sfrf %1106
  %p1108 = scmp.eq.s32.totalorder %s1107, 0
  %p1109 = pneg %p1108
  %1111 = shalt.err (%p1109)

// kernel: tpu_custom_call.1
$region0: #{tpu_custom_call.1}
  #allocation0 [shape = 'u32[]', space=smem, size = 0x4, offset = 0x4, fixed_abs, tag = 'smem constant byte address 0x4 - core index']
  #allocation1 [shape = 'u32[144,128]{1,0:T(1,128)}', space=vmem, size = 0x12000, scoped, tag = 'internal scratch']
  #allocation2 [shape = 'bf16[128,128]{1,0:T(16,128)(2,1)}', space=vmem, size = 0x8000, scoped, tag = 'scratch operand']
  #allocation3 [shape = 'bf16[128,128]{1,0:T(16,128)(2,1)}', space=vmem, size = 0x8000, scoped, tag = 'scratch operand']
  #allocation4 [shape = 's32[1]{0}', space=sflag, size = 0x4, scoped, tag = 'scratch operand']
  #allocation11 [shape = 's32[]', space=sflag, size = 0x4, offset = 0, fixed_abs, tag = 'sflag constant byte address 0x0 - dummy sync flag']
  #allocation12 [shape = 's32[]', space=sflag, size = 0x4, offset = 0, fixed_abs, tag = 'sflag constant byte address 0x0 - dummy sync flag']
  #allocation13 [shape = 'u32[]', space=smem, size = 0x4, offset = 0x44, fixed_abs, tag = 'smem constant byte address 0x44 - assertion arg 0']
  #allocation14 [shape = 'u32[]', space=smem, size = 0x4, offset = 0x48, fixed_abs, tag = 'smem constant byte address 0x48 - assertion arg 1']
  %s0 = inlined_call_operand.hbm [shape: bf16[128,128], index: 0, kind: input, shape index: {}]
  %s1 = inlined_call_operand.hbm [shape: f32[3,128,128], index: 1, kind: input, shape index: {}]
  %s2 = inlined_call_operand.vmem [shape: f32[3,1,128], index: 2, kind: input, shape index: {}]
  %s3 = inlined_call_operand.hbm [shape: bf16[128,128], index: 3, kind: input, shape index: {}]
  %s4 = inlined_call_operand.hbm [shape: f32[128,128], index: 4, kind: output, shape index: {}]
  %s5 = sld [smem:[#allocation0]]
  $region85: #{tpu_custom_call.1} parent=0
    _
  %s7 = ssub.s32 1, %s5
  %s8 = scalar_select 0, %s7, %s5
  $region1: #{tpu_custom_call.1} parent=0
    #allocation5 [shape = 'u8[32768]{0}', space=vmem, size = 0x8000, scoped, tag = 'input window, operand 0, single buffered']
    #allocation6 [shape = 's32[2]{0}', space=sflag, size = 0x8, scoped, tag = 'scoped memory for tpu_custom_call.1']
    #allocation7 [shape = 's32[2]{0}', space=sflag, size = 0x8, scoped, tag = 'scoped memory for tpu_custom_call.1']
    #allocation8 [shape = 'u8[131072]{0}', space=vmem, size = 0x20000, scoped, tag = 'input window, operand 1']
    #allocation9 [shape = 's32[2]{0}', space=sflag, size = 0x8, scoped, tag = 'scoped memory for tpu_custom_call.1']
    #allocation10 [shape = 'u8[65536]{0}', space=vmem, size = 0x10000, scoped, tag = 'output window, operand 0, single buffered']
    %9 = vsyncpa [#allocation6], 0
    %10 = vsyncpa [#allocation9], 0
    %s11 = scalar_lea.sflag [#allocation9], 1
    %12 = vsyncpa %s11, 0
    %13 = vsyncpa [#allocation7], 0
    loop: start=0, step=1, limit=5
    $region2: #{tpu_custom_call.1} parent=1 // loop_pre_header
      _
    $region3: #{tpu_custom_call.1} parent=1 // loop_header
      %s15 = sphi 0, %s19
      %p16 = scmp.ge.s32.totalorder %s15, 5
      %s22 = sphi 0, %s34
      %s23 = sphi 0, %s30
      %s24 = sphi 0, %s22
      %s25 = sphi 0, %s23
      %s26 = sphi 0, %s24
      %s27 = sphi 0, %s25
      %s37 = sphi 0, %s39
      %s40 = sphi 0, %s37
      %s41 = sphi 0, %s40
      %s57 = sphi 0, %s41
      %s63 = sphi 0, %s65
      %s66 = sphi 0, %s63
      %s67 = sphi 0, %s66
      %s83 = sphi 0, %s67
      %s89 = sphi 0, %s91
      %s92 = sphi 0, %s89
      %s93 = sphi 0, %s92
      %s109 = sphi 0, %s93
      %s115 = sphi 0, %s117
      %s118 = sphi 0, %s115
      %s119 = sphi 0, %s118
      %s135 = sphi 0, %s119
    $region4: #{tpu_custom_call.1} parent=1 // loop_header_branch
      %18 = sbr.rel (%p16) target = $region8
    $region5: #{tpu_custom_call.1} parent=1 // loop_body
      %s20 = ssub.s32 %s15, 1
      %s21 = ssub.s32 %s15, 2
      %s28 = sadd.s32 1, %s23
      %p29 = scmp.ge.s32.totalorder %s28, 1
      %s30 = scalar_select %p29, 0, %s28
      %s31 = sadd.s32 1, %s22
      %s32 = scalar_select %p29, %s31, %s22
      %p33 = scmp.ge.s32.totalorder %s32, 3
      %s34 = scalar_select %p33, 0, %s32
      %s35 = ssub.s32 %s23, %s30
      %p36 = scmp.eq.s32.totalorder %s35, 0
      %s38 = sadd.s32 %s37, 1
      %s39 = scalar_select %p36, %s37, %s38
      %p42 = pneg %p36
      %p43 = scmp.eq.s32.totalorder %s15, 2
      %p44 = por %p42, %p43
      %p45 = scmp.ne.s32.totalorder %s37, %s40
      %p46 = scmp.eq.s32.totalorder %s15, 0
      %p47 = por %p45, %p46
      %p48 = scmp.ne.s32.totalorder %s37, %s40
      %p49 = scmp.eq.s32.totalorder %s20, 2
      %p50 = por %p48, %p49
      %p51 = scmp.ne.s32.totalorder %s40, %s41
      %p52 = scmp.eq.s32.totalorder %s20, 0
      %p53 = por %p51, %p52
      %p54 = scmp.ne.s32.totalorder %s40, %s41
      %p55 = scmp.eq.s32.totalorder %s21, 2
      %p56 = por %p54, %p55
      %p58 = scmp.ne.s32.totalorder %s41, %s57
      %p59 = scmp.eq.s32.totalorder %s21, 0
      %p60 = por %p58, %p59
      %s61 = ssub.s32 %s22, %s34
      %p62 = scmp.eq.s32.totalorder %s61, 0
      %s64 = sadd.s32 %s63, 1
      %s65 = scalar_select %p62, %s63, %s64
      %p68 = pneg %p62
      %p69 = scmp.eq.s32.totalorder %s15, 2
      %p70 = por %p68, %p69
      %p71 = scmp.ne.s32.totalorder %s63, %s66
      %p72 = scmp.eq.s32.totalorder %s15, 0
      %p73 = por %p71, %p72
      %p74 = scmp.ne.s32.totalorder %s63, %s66
      %p75 = scmp.eq.s32.totalorder %s20, 2
      %p76 = por %p74, %p75
      %p77 = scmp.ne.s32.totalorder %s66, %s67
      %p78 = scmp.eq.s32.totalorder %s20, 0
      %p79 = por %p77, %p78
      %p80 = scmp.ne.s32.totalorder %s66, %s67
      %p81 = scmp.eq.s32.totalorder %s21, 2
      %p82 = por %p80, %p81
      %p84 = scmp.ne.s32.totalorder %s67, %s83
      %p85 = scmp.eq.s32.totalorder %s21, 0
      %p86 = por %p84, %p85
      %s87 = ssub.s32 %s22, %s34
      %p88 = scmp.eq.s32.totalorder %s87, 0
      %s90 = sadd.s32 %s89, 1
      %s91 = scalar_select %p88, %s89, %s90
      %p94 = pneg %p88
      %p95 = scmp.eq.s32.totalorder %s15, 2
      %p96 = por %p94, %p95
      %p97 = scmp.ne.s32.totalorder %s89, %s92
      %p98 = scmp.eq.s32.totalorder %s15, 0
      %p99 = por %p97, %p98
      %p100 = scmp.ne.s32.totalorder %s89, %s92
      %p101 = scmp.eq.s32.totalorder %s20, 2
      %p102 = por %p100, %p101
      %p103 = scmp.ne.s32.totalorder %s92, %s93
      %p104 = scmp.eq.s32.totalorder %s20, 0
      %p105 = por %p103, %p104
      %p106 = scmp.ne.s32.totalorder %s92, %s93
      %p107 = scmp.eq.s32.totalorder %s21, 2
      %p108 = por %p106, %p107
      %p110 = scmp.ne.s32.totalorder %s93, %s109
      %p111 = scmp.eq.s32.totalorder %s21, 0
      %p112 = por %p110, %p111
      %s113 = ssub.s32 %s23, %s30
      %p114 = scmp.eq.s32.totalorder %s113, 0
      %s116 = sadd.s32 %s115, 1
      %s117 = scalar_select %p114, %s115, %s116
      %p120 = pneg %p114
      %p121 = scmp.eq.s32.totalorder %s15, 2
      %p122 = por %p120, %p121
      %p123 = scmp.ne.s32.totalorder %s115, %s118
      %p124 = scmp.eq.s32.totalorder %s15, 0
      %p125 = por %p123, %p124
      %p126 = scmp.ne.s32.totalorder %s115, %s118
      %p127 = scmp.eq.s32.totalorder %s20, 2
      %p128 = por %p126, %p127
      %p129 = scmp.ne.s32.totalorder %s118, %s119
      %p130 = scmp.eq.s32.totalorder %s20, 0
      %p131 = por %p129, %p130
      %p132 = scmp.ne.s32.totalorder %s118, %s119
      %p133 = scmp.eq.s32.totalorder %s21, 2
      %p134 = por %p132, %p133
      %p136 = scmp.ne.s32.totalorder %s119, %s135
      %p137 = scmp.eq.s32.totalorder %s21, 0
      %p138 = por %p136, %p137
      %p139 = scmp.le.s32.totalorder 1, %s15
      %p140 = scmp.lt.s32.totalorder %s15, 4
      %p141 = pnand %p139, %p140
      %p142 = pneg %p141
      // Predicated region
      $region9: #{tpu_custom_call.1} parent=5 // pred_check
        _
      $region10: #{tpu_custom_call.1} parent=5 // pred_check_branch
        %144 = sbr.rel (%p141) target = $region12
      $region11: #{tpu_custom_call.1} parent=5 // pred_region
        %s145 = ssub.s32 %s15, 1
        // Predicated region
        $region13: #{tpu_custom_call.1} parent=11 // pred_check
          %p146 = pneg %p53
        $region14: #{tpu_custom_call.1} parent=11 // pred_check_branch
          %148 = sbr.rel (%p146) target = $region16
        $region15: #{tpu_custom_call.1} parent=11 // pred_region
          %s149 = smul.u32 16, %s25
          %s151 = ssub.s32 1024, 1024
          %152 = vsyncadd [#allocation6], %s151
          %s153 = smul.addr %s149, 64
          %s154 = scalar_lea.hbm %s0, %s153
          %s155 = sshll.u32 [#allocation5], 4
          %s156 = int_to_ptr.vmem [resolvable:$true] %s155
          %161 = dma.hbm_to_vmem [thread:$0]  %s154, 1024, %s156, [#allocation6], 64, 64, 4
        $region16: #{tpu_custom_call.1} parent=11 // pred_fallthru
          _
      $region12: #{tpu_custom_call.1} parent=5 // pred_fallthru
        _
      %p162 = scmp.lt.s32.totalorder %s15, 3
      // Predicated region
      $region17: #{tpu_custom_call.1} parent=5 // pred_check
        %p163 = pneg %p162
      $region18: #{tpu_custom_call.1} parent=5 // pred_check_branch
        %165 = sbr.rel (%p163) target = $region20
      $region19: #{tpu_custom_call.1} parent=5 // pred_region
        // Predicated region
        $region21: #{tpu_custom_call.1} parent=19 // pred_check
          %p166 = pneg %p73
        $region22: #{tpu_custom_call.1} parent=19 // pred_check_branch
          %168 = sbr.rel (%p166) target = $region24
        $region23: #{tpu_custom_call.1} parent=19 // pred_region
          %s169 = sand.u32 %s63, 1
          %s170 = scalar_lea.sflag [#allocation9], %s169
          %s171 = sand.u32 %s63, 1
          %s172 = smul.addr %s171, 128
          %s173 = scalar_lea.vmem [#allocation8], %s172
          %s175 = ssub.s32 2048, 2048
          %176 = vsyncadd %s170, %s175
          %s177 = smul.addr %s22, 16
          %s178 = smul.addr %s177, 128
          %s179 = scalar_lea.hbm %s1, %s178
          %s180 = sshll.u32 %s173, 4
          %s181 = int_to_ptr.vmem [resolvable:$true] %s180
          %186 = dma.hbm_to_vmem [thread:$0]  %s179, 2048, %s181, %s170, 128, 128, 8
        $region24: #{tpu_custom_call.1} parent=19 // pred_fallthru
          _
        // Predicated region
        $region25: #{tpu_custom_call.1} parent=19 // pred_check
          %p187 = pneg %p99
        $region26: #{tpu_custom_call.1} parent=19 // pred_check_branch
          %189 = sbr.rel (%p187) target = $region28
        $region27: #{tpu_custom_call.1} parent=19 // pred_region
          %p190 = scmp.lt.s32.totalorder %s22, 2
          %s191 = scalar_select %p190, %s22, 2
          %s192 = scalar_lea.vmem %s2, %s191
        $region28: #{tpu_custom_call.1} parent=19 // pred_fallthru
          _
      $region20: #{tpu_custom_call.1} parent=5 // pred_fallthru
        _
      %p193 = scmp.le.s32.totalorder 1, %s15
      %p194 = scmp.lt.s32.totalorder %s15, 4
      %p195 = pnand %p193, %p194
      %p196 = pneg %p195
      // Predicated region
      $region29: #{tpu_custom_call.1} parent=5 // pred_check
        _
      $region30: #{tpu_custom_call.1} parent=5 // pred_check_branch
        %198 = sbr.rel (%p195) target = $region32
      $region31: #{tpu_custom_call.1} parent=5 // pred_region
        %s199 = ssub.s32 %s15, 1
        // Predicated region
        $region33: #{tpu_custom_call.1} parent=31 // pred_check
          %p200 = pneg %p53
        $region34: #{tpu_custom_call.1} parent=31 // pred_check_branch
          %202 = sbr.rel (%p200) target = $region36
        $region35: #{tpu_custom_call.1} parent=31 // pred_region
          %203 = dma.done [#allocation6], 1024
        $region36: #{tpu_custom_call.1} parent=31 // pred_fallthru
          _
        %s204 = sand.u32 %s66, 1
        %s205 = scalar_lea.sflag [#allocation9], %s204
        %s206 = sand.u32 %s66, 1
        %s207 = smul.addr %s206, 128
        %s208 = scalar_lea.vmem [#allocation8], %s207
        // Predicated region
        $region37: #{tpu_custom_call.1} parent=31 // pred_check
          %p209 = pneg %p79
        $region38: #{tpu_custom_call.1} parent=31 // pred_check_branch
          %211 = sbr.rel (%p209) target = $region40
        $region39: #{tpu_custom_call.1} parent=31 // pred_region
          %212 = dma.done %s205, 2048
        $region40: #{tpu_custom_call.1} parent=31 // pred_fallthru
          _
        %p213 = pneg %p53
        %p214 = pneg %p50
        %s215 = sand.u32 %s66, 1
        %s216 = scalar_lea.sflag [#allocation9], %s215
        %s217 = sand.u32 %s66, 1
        %s218 = smul.addr %s217, 128
        %s219 = scalar_lea.vmem [#allocation8], %s218
        %p220 = pneg %p79
        %p221 = pneg %p76
        %p222 = scmp.lt.s32.totalorder %s24, 2
        %s223 = scalar_select %p222, %s24, 2
        %s224 = scalar_lea.vmem %s2, %s223
        %p225 = pneg %p105
        %p226 = pneg %p102
        %p227 = pneg %p131
        %p228 = pneg %p128
        %s229 = smul.u32 16, %s25
        %p230 = scmp.lt.s32.totalorder %s24, 2
        %s231 = scalar_select %p230, %s24, 2
        %s232 = scalar_lea.vmem %s2, %s231
        %s233 = smul.u32 16, %s25
        %p235 = scmp.eq.s32.totalorder %s24, 0
        %p236 = scmp.eq.s32.totalorder %s25, 0
        %p237 = pnand %p235, %p236
        %p238 = pneg %p237
        // Predicated region
        $region41: #{tpu_custom_call.1} parent=31 // pred_check
          _
        $region42: #{tpu_custom_call.1} parent=31 // pred_check_branch
          %240 = sbr.rel (%p237) target = $region44
        $region43: #{tpu_custom_call.1} parent=31 // pred_region
          // Predicated region
          $region45: #{tpu_custom_call.1} parent=43 // pred_check
            _
          $region46: #{tpu_custom_call.1} parent=43 // pred_check_branch
            %242 = sbr.rel target = $region48
          $region47: #{tpu_custom_call.1} parent=43 // pred_region
            %243 = sst [smem:[#allocation13]] [#allocation12]
            %244 = sst [smem:[#allocation14]] [#allocation11]
          $region48: #{tpu_custom_call.1} parent=43 // pred_fallthru
            _
          %246 = shalt.err (0)
          %s248 = sshll.u32 [#allocation2], 4
          %s249 = int_to_ptr.vmem [resolvable:$true] %s248
          %251 = dma.hbm_to_vmem [thread:$0]  %s3, 1024, %s249, [#allocation4]
          %s252 = smul.u32 4, 16
          %s253 = smul.u32 %s252, 1
          %s254 = sshll.u32 %s253, 4
          %255 = dma.done [#allocation4], %s254
        $region44: #{tpu_custom_call.1} parent=31 // pred_fallthru
          _
        %p256 = scmp.lt.s32.totalorder %s24, 0
        %s257 = ssub.s32 0, %s24
        %s258 = scalar_select %p256, %s257, %s24
        %s259 = sand.u32 %s258, 1
        %s260 = ssub.s32 0, %s259
        %s261 = scalar_select %p256, %s260, %s259
        %p262 = scmp.ne.s32.totalorder %s261, 0
        %p263 = scmp.lt.s32.totalorder %s261, 0
        %p264 = pnand %p263, %p262
        %p265 = pneg %p264
        %s266 = sadd.s32 %s261, 2
        %s267 = scalar_select %p265, %s266, %s261
        %p268 = scmp.eq.s32.totalorder %s267, 0
        // Predicated region
        $region49: #{tpu_custom_call.1} parent=31 // pred_check
          %p269 = pneg %p268
        $region50: #{tpu_custom_call.1} parent=31 // pred_check_branch
          %271 = sbr.rel (%p269) target = $region52
        $region51: #{tpu_custom_call.1} parent=31 // pred_region
          %v272 = vld [vmem:[#allocation5] sm:$0xf]
          %v273 = vld [vmem:[#allocation5 + $0x4] sm:$0xf]
          %v274 = vld [vmem:[#allocation5 + $0x8] sm:$0xf]
          %v275 = vld [vmem:[#allocation5 + $0xc] sm:$0xf]
          %v276 = vld [vmem:[#allocation5 + $0x10] sm:$0xf]
          %v277 = vld [vmem:[#allocation5 + $0x14] sm:$0xf]
          %v278 = vld [vmem:[#allocation5 + $0x18] sm:$0xf]
          %v279 = vld [vmem:[#allocation5 + $0x1c] sm:$0xf]
          %v280 = vld [vmem:[#allocation5 + $0x20] sm:$0xf]
          %v281 = vld [vmem:[#allocation5 + $0x24] sm:$0xf]
          %v282 = vld [vmem:[#allocation5 + $0x28] sm:$0xf]
          %v283 = vld [vmem:[#allocation5 + $0x2c] sm:$0xf]
          %v284 = vld [vmem:[#allocation5 + $0x30] sm:$0xf]
          %v285 = vld [vmem:[#allocation5 + $0x34] sm:$0xf]
          %v286 = vld [vmem:[#allocation5 + $0x38] sm:$0xf]
          %v287 = vld [vmem:[#allocation5 + $0x3c] sm:$0xf]
          %v288 = vld [vmem:[#allocation2] sm:$0xff]
          %v289 = vld [vmem:[#allocation2 + $0x8] sm:$0xff]
          %v290 = vld [vmem:[#allocation2 + $0x10] sm:$0xff]
          %v291 = vld [vmem:[#allocation2 + $0x18] sm:$0xff]
          %v292 = vld [vmem:[#allocation2 + $0x20] sm:$0xff]
          %v293 = vld [vmem:[#allocation2 + $0x28] sm:$0xff]
          %v294 = vld [vmem:[#allocation2 + $0x30] sm:$0xff]
          %v295 = vld [vmem:[#allocation2 + $0x38] sm:$0xff]
          %v296 = vld [vmem:[%s232] sm:$0x1]
          %v298 = vlaneseq
          %v299 = vshrl.u32 %v298, 7
          %v300 = vsub.s32 0, %v299
          %v301 = vrot.slane %v296, %v300
          %v319 = vunpack.c.l.b16 %v272
          %v320 = vunpack.c.l.b16 %v273
          %v321 = vunpack.c.l.b16 %v274
          %v322 = vunpack.c.l.b16 %v275
          %v323 = vunpack.c.l.b16 %v276
          %v324 = vunpack.c.l.b16 %v277
          %v325 = vunpack.c.l.b16 %v278
          %v326 = vunpack.c.l.b16 %v279
          %v327 = vunpack.c.l.b16 %v280
          %v328 = vunpack.c.l.b16 %v281
          %v329 = vunpack.c.l.b16 %v282
          %v330 = vunpack.c.l.b16 %v283
          %v331 = vunpack.c.l.b16 %v284
          %v332 = vunpack.c.l.b16 %v285
          %v333 = vunpack.c.l.b16 %v286
          %v334 = vunpack.c.l.b16 %v287
          %v335 = vpack.c.b16 %v320, %v319
          %v336 = vpack.c.b16 %v322, %v321
          %v337 = vpack.c.b16 %v324, %v323
          %v338 = vpack.c.b16 %v326, %v325
          %v339 = vpack.c.b16 %v328, %v327
          %v340 = vpack.c.b16 %v330, %v329
          %v341 = vpack.c.b16 %v332, %v331
          %v342 = vpack.c.b16 %v334, %v333
          %351 = vmatprep.subr.bf16.mxu0 0
          %352 = vmatpush1.bf16.msra.mxu0 %v288
          %353 = vmatprep.subr.bf16.mxu0 0
          %354 = vmatpush1.bf16.msra.mxu0 %v289
          %355 = vmatprep.subr.bf16.mxu0 0
          %356 = vmatpush1.bf16.msra.mxu0 %v290
          %357 = vmatprep.subr.bf16.mxu0 0
          %358 = vmatpush1.bf16.msra.mxu0 %v291
          %359 = vmatprep.subr.bf16.mxu0 0
          %360 = vmatpush1.bf16.msra.mxu0 %v292
          %361 = vmatprep.subr.bf16.mxu0 0
          %362 = vmatpush1.bf16.msra.mxu0 %v293
          %363 = vmatprep.subr.bf16.mxu0 0
          %364 = vmatpush1.bf16.msra.mxu0 %v294
          %365 = vmatprep.subr.bf16.mxu0 0
          %366 = vmatpush1.bf16.msra.mxu0 %v295
          %367 = vmatprep.subr.bf16.mxu0 0
          %368 = vmatpush1.bf16.msra.mxu0 0
          %369 = vmatprep.subr.bf16.mxu0 0
          %370 = vmatpush1.bf16.msra.mxu0 0
          %371 = vmatprep.subr.bf16.mxu0 0
          %372 = vmatpush1.bf16.msra.mxu0 0
          %373 = vmatprep.subr.bf16.mxu0 0
          %374 = vmatpush1.bf16.msra.mxu0 0
          %375 = vmatprep.subr.bf16.mxu0 0
          %376 = vmatpush1.bf16.msra.mxu0 0
          %377 = vmatprep.subr.bf16.mxu0 0
          %378 = vmatpush1.bf16.msra.mxu0 0
          %379 = vmatprep.subr.bf16.mxu0 0
          %380 = vmatpush1.bf16.msra.mxu0 0
          %381 = vmatprep.subr.bf16.mxu0 0
          %382 = vmatpush1.bf16.msra.mxu0 0
          %383 = vmatprep.mubr.bf16.mxu0 0
          %384 = vmatmul.mubr.bf16.gmra.mrb[0].mxu0 %v335
          %v385 = vpop.f32.mrb[0].mxu0
          %v386 = vadd.f32 %v301, %v385
          %v387 = vpop.f32.mrb[0].mxu0
          %v388 = vpop.f32.mrb[0].mxu0
          %v389 = vadd.f32 %v301, %v388
          %v390 = vpop.f32.mrb[0].mxu0
          %391 = vmatprep.mubr.bf16.mxu0 0
          %392 = vmatmul.mubr.bf16.gmra.mrb[0].mxu0 %v336
          %v393 = vpop.f32.mrb[0].mxu0
          %v394 = vadd.f32 %v301, %v393
          %v395 = vpop.f32.mrb[0].mxu0
          %v396 = vpop.f32.mrb[0].mxu0
          %v397 = vadd.f32 %v301, %v396
          %v398 = vpop.f32.mrb[0].mxu0
          %399 = vmatprep.mubr.bf16.mxu0 0
          %400 = vmatmul.mubr.bf16.gmra.mrb[0].mxu0 %v337
          %v401 = vpop.f32.mrb[0].mxu0
          %v402 = vadd.f32 %v301, %v401
          %v403 = vpop.f32.mrb[0].mxu0
          %v404 = vpop.f32.mrb[0].mxu0
          %v405 = vadd.f32 %v301, %v404
          %v406 = vpop.f32.mrb[0].mxu0
          %407 = vmatprep.mubr.bf16.mxu0 0
          %408 = vmatmul.mubr.bf16.gmra.mrb[0].mxu0 %v338
          %v409 = vpop.f32.mrb[0].mxu0
          %v410 = vadd.f32 %v301, %v409
          %v411 = vpop.f32.mrb[0].mxu0
          %v412 = vpop.f32.mrb[0].mxu0
          %v413 = vadd.f32 %v301, %v412
          %v414 = vpop.f32.mrb[0].mxu0
          %415 = vmatprep.mubr.bf16.mxu0 0
          %416 = vmatmul.mubr.bf16.gmra.mrb[0].mxu0 %v339
          %v417 = vpop.f32.mrb[0].mxu0
          %v418 = vadd.f32 %v301, %v417
          %v419 = vpop.f32.mrb[0].mxu0
          %v420 = vpop.f32.mrb[0].mxu0
          %v421 = vadd.f32 %v301, %v420
          %v422 = vpop.f32.mrb[0].mxu0
          %423 = vmatprep.mubr.bf16.mxu0 0
          %424 = vmatmul.mubr.bf16.gmra.mrb[0].mxu0 %v340
          %v425 = vpop.f32.mrb[0].mxu0
          %v426 = vadd.f32 %v301, %v425
          %v427 = vpop.f32.mrb[0].mxu0
          %v428 = vpop.f32.mrb[0].mxu0
          %v429 = vadd.f32 %v301, %v428
          %v430 = vpop.f32.mrb[0].mxu0
          %431 = vmatprep.mubr.bf16.mxu0 0
          %432 = vmatmul.mubr.bf16.gmra.mrb[0].mxu0 %v341
          %v433 = vpop.f32.mrb[0].mxu0
          %v434 = vadd.f32 %v301, %v433
          %v435 = vpop.f32.mrb[0].mxu0
          %v436 = vpop.f32.mrb[0].mxu0
          %v437 = vadd.f32 %v301, %v436
          %v438 = vpop.f32.mrb[0].mxu0
          %439 = vmatprep.mubr.bf16.mxu0 0
          %440 = vmatmul.mubr.bf16.gmra.mrb[0].mxu0 %v342
          %v441 = vpop.f32.mrb[0].mxu0
          %v442 = vadd.f32 %v301, %v441
          %v443 = vpop.f32.mrb[0].mxu0
          %v444 = vpop.f32.mrb[0].mxu0
          %v445 = vadd.f32 %v301, %v444
          %v446 = vpop.f32.mrb[0].mxu0
          %447 = vdwg.mxu0
          %v448 = vmax.f32 %v386, 0.0
          %v449 = vmax.f32 %v389, 0.0
          %v450 = vmax.f32 %v394, 0.0
          %v451 = vmax.f32 %v397, 0.0
          %v452 = vmax.f32 %v402, 0.0
          %v453 = vmax.f32 %v405, 0.0
          %v454 = vmax.f32 %v410, 0.0
          %v455 = vmax.f32 %v413, 0.0
          %v456 = vmax.f32 %v418, 0.0
          %v457 = vmax.f32 %v421, 0.0
          %v458 = vmax.f32 %v426, 0.0
          %v459 = vmax.f32 %v429, 0.0
          %v460 = vmax.f32 %v434, 0.0
          %v461 = vmax.f32 %v437, 0.0
          %v462 = vmax.f32 %v442, 0.0
          %v463 = vmax.f32 %v445, 0.0
          %p464 = scmp.lt.s32.totalorder %s24, 2
          // Predicated region
          $region53: #{tpu_custom_call.1} parent=51 // pred_check
            %p465 = pneg %p464
          $region54: #{tpu_custom_call.1} parent=51 // pred_check_branch
            %467 = sbr.rel (%p465) target = $region56
          $region55: #{tpu_custom_call.1} parent=51 // pred_region
            %s468 = smul.u32 %s25, 128
            %v469 = vld [vmem:[%s208] sm:$0xff]
            %v470 = vld [vmem:[%s208 + $0x8] sm:$0xff]
            %v471 = vld [vmem:[%s208 + $0x10] sm:$0xff]
            %v472 = vld [vmem:[%s208 + $0x18] sm:$0xff]
            %v473 = vld [vmem:[%s208 + $0x20] sm:$0xff]
            %v474 = vld [vmem:[%s208 + $0x28] sm:$0xff]
            %v475 = vld [vmem:[%s208 + $0x30] sm:$0xff]
            %v476 = vld [vmem:[%s208 + $0x38] sm:$0xff]
            %v477 = vld [vmem:[%s208 + $0x40] sm:$0xff]
            %v478 = vld [vmem:[%s208 + $0x48] sm:$0xff]
            %v479 = vld [vmem:[%s208 + $0x50] sm:$0xff]
            %v480 = vld [vmem:[%s208 + $0x58] sm:$0xff]
            %v481 = vld [vmem:[%s208 + $0x60] sm:$0xff]
            %v482 = vld [vmem:[%s208 + $0x68] sm:$0xff]
            %v483 = vld [vmem:[%s208 + $0x70] sm:$0xff]
            %v484 = vld [vmem:[%s208 + $0x78] sm:$0xff]
            %485 = vmatprep.subr.mxu0 0.0
            %486 = vmatpush1.msra.mxu0 %v469
            %487 = vmatprep.subr.mxu0 0.0
            %488 = vmatpush1.msra.mxu0 %v470
            %489 = vmatprep.subr.mxu0 0.0
            %490 = vmatpush1.msra.mxu0 %v471
            %491 = vmatprep.subr.mxu0 0.0
            %492 = vmatpush1.msra.mxu0 %v472
            %493 = vmatprep.subr.mxu0 0.0
            %494 = vmatpush1.msra.mxu0 %v473
            %495 = vmatprep.subr.mxu0 0.0
            %496 = vmatpush1.msra.mxu0 %v474
            %497 = vmatprep.subr.mxu0 0.0
            %498 = vmatpush1.msra.mxu0 %v475
            %499 = vmatprep.subr.mxu0 0.0
            %500 = vmatpush1.msra.mxu0 %v476
            %501 = vmatprep.subr.mxu0 0.0
            %502 = vmatpush1.msra.mxu0 %v477
            %503 = vmatprep.subr.mxu0 0.0
            %504 = vmatpush1.msra.mxu0 %v478
            %505 = vmatprep.subr.mxu0 0.0
            %506 = vmatpush1.msra.mxu0 %v479
            %507 = vmatprep.subr.mxu0 0.0
            %508 = vmatpush1.msra.mxu0 %v480
            %509 = vmatprep.subr.mxu0 0.0
            %510 = vmatpush1.msra.mxu0 %v481
            %511 = vmatprep.subr.mxu0 0.0
            %512 = vmatpush1.msra.mxu0 %v482
            %513 = vmatprep.subr.mxu0 0.0
            %514 = vmatpush1.msra.mxu0 %v483
            %515 = vmatprep.subr.mxu0 0.0
            %516 = vmatpush1.msra.mxu0 %v484
            %517 = vmatprep.subr.mxu0 0.0
            %518 = vmatpush1.msra.mxu0 0.0
            %519 = vmatprep.subr.mxu0 0.0
            %520 = vmatpush1.msra.mxu0 0.0
            %521 = vmatprep.subr.mxu0 0.0
            %522 = vmatpush1.msra.mxu0 0.0
            %523 = vmatprep.subr.mxu0 0.0
            %524 = vmatpush1.msra.mxu0 0.0
            %525 = vmatprep.subr.mxu0 0.0
            %526 = vmatpush1.msra.mxu0 0.0
            %527 = vmatprep.subr.mxu0 0.0
            %528 = vmatpush1.msra.mxu0 0.0
            %529 = vmatprep.subr.mxu0 0.0
            %530 = vmatpush1.msra.mxu0 0.0
            %531 = vmatprep.subr.mxu0 0.0
            %532 = vmatpush1.msra.mxu0 0.0
            %533 = vmatprep.subr.mxu0 0.0
            %534 = vmatpush1.msra.mxu0 0.0
            %535 = vmatprep.subr.mxu0 0.0
            %536 = vmatpush1.msra.mxu0 0.0
            %537 = vmatprep.subr.mxu0 0.0
            %538 = vmatpush1.msra.mxu0 0.0
            %539 = vmatprep.subr.mxu0 0.0
            %540 = vmatpush1.msra.mxu0 0.0
            %541 = vmatprep.subr.mxu0 0.0
            %542 = vmatpush1.msra.mxu0 0.0
            %543 = vmatprep.subr.mxu0 0.0
            %544 = vmatpush1.msra.mxu0 0.0
            %545 = vmatprep.subr.mxu0 0.0
            %546 = vmatpush1.msra.mxu0 0.0
            %547 = vmatprep.subr.mxu0 0.0
            %548 = vmatpush1.msra.mxu0 0.0
            %549 = vmatprep.mubr.f32.mxu0 0.0
            %550 = vmatmul.mubr.f32.gmra.mrb[0].mxu0 %v448
            %v551 = vpop.f32.mrb[0].mxu0
            %v552 = vadd.f32 0.0, %v551
            %v553 = vpop.f32.mrb[0].mxu0
            %554 = vmatprep.mubr.f32.mxu0 0.0
            %555 = vmatmul.mubr.f32.gmra.mrb[0].mxu0 %v449
            %v556 = vpop.f32.mrb[0].mxu0
            %v557 = vadd.f32 0.0, %v556
            %v558 = vpop.f32.mrb[0].mxu0
            %559 = vmatprep.mubr.f32.mxu0 0.0
            %560 = vmatmul.mubr.f32.gmra.mrb[0].mxu0 %v450
            %v561 = vpop.f32.mrb[0].mxu0
            %v562 = vadd.f32 0.0, %v561
            %v563 = vpop.f32.mrb[0].mxu0
            %564 = vmatprep.mubr.f32.mxu0 0.0
            %565 = vmatmul.mubr.f32.gmra.mrb[0].mxu0 %v451
            %v566 = vpop.f32.mrb[0].mxu0
            %v567 = vadd.f32 0.0, %v566
            %v568 = vpop.f32.mrb[0].mxu0
            %569 = vmatprep.mubr.f32.mxu0 0.0
            %570 = vmatmul.mubr.f32.gmra.mrb[0].mxu0 %v452
            %v571 = vpop.f32.mrb[0].mxu0
            %v572 = vadd.f32 0.0, %v571
            %v573 = vpop.f32.mrb[0].mxu0
            %574 = vmatprep.mubr.f32.mxu0 0.0
            %575 = vmatmul.mubr.f32.gmra.mrb[0].mxu0 %v453
            %v576 = vpop.f32.mrb[0].mxu0
            %v577 = vadd.f32 0.0, %v576
            %v578 = vpop.f32.mrb[0].mxu0
            %579 = vmatprep.mubr.f32.mxu0 0.0
            %580 = vmatmul.mubr.f32.gmra.mrb[0].mxu0 %v454
            %v581 = vpop.f32.mrb[0].mxu0
            %v582 = vadd.f32 0.0, %v581
            %v583 = vpop.f32.mrb[0].mxu0
            %584 = vmatprep.mubr.f32.mxu0 0.0
            %585 = vmatmul.mubr.f32.gmra.mrb[0].mxu0 %v455
            %v586 = vpop.f32.mrb[0].mxu0
            %v587 = vadd.f32 0.0, %v586
            %v588 = vpop.f32.mrb[0].mxu0
            %589 = vmatprep.mubr.f32.mxu0 0.0
            %590 = vmatmul.mubr.f32.gmra.mrb[0].mxu0 %v456
            %v591 = vpop.f32.mrb[0].mxu0
            %v592 = vadd.f32 0.0, %v591
            %v593 = vpop.f32.mrb[0].mxu0
            %594 = vmatprep.mubr.f32.mxu0 0.0
            %595 = vmatmul.mubr.f32.gmra.mrb[0].mxu0 %v457
            %v596 = vpop.f32.mrb[0].mxu0
            %v597 = vadd.f32 0.0, %v596
            %v598 = vpop.f32.mrb[0].mxu0
            %599 = vmatprep.mubr.f32.mxu0 0.0
            %600 = vmatmul.mubr.f32.gmra.mrb[0].mxu0 %v458
            %v601 = vpop.f32.mrb[0].mxu0
            %v602 = vadd.f32 0.0, %v601
            %v603 = vpop.f32.mrb[0].mxu0
            %604 = vmatprep.mubr.f32.mxu0 0.0
            %605 = vmatmul.mubr.f32.gmra.mrb[0].mxu0 %v459
            %v606 = vpop.f32.mrb[0].mxu0
            %v607 = vadd.f32 0.0, %v606
            %v608 = vpop.f32.mrb[0].mxu0
            %609 = vmatprep.mubr.f32.mxu0 0.0
            %610 = vmatmul.mubr.f32.gmra.mrb[0].mxu0 %v460
            %v611 = vpop.f32.mrb[0].mxu0
            %v612 = vadd.f32 0.0, %v611
            %v613 = vpop.f32.mrb[0].mxu0
            %614 = vmatprep.mubr.f32.mxu0 0.0
            %615 = vmatmul.mubr.f32.gmra.mrb[0].mxu0 %v461
            %v616 = vpop.f32.mrb[0].mxu0
            %v617 = vadd.f32 0.0, %v616
            %v618 = vpop.f32.mrb[0].mxu0
            %619 = vmatprep.mubr.f32.mxu0 0.0
            %620 = vmatmul.mubr.f32.gmra.mrb[0].mxu0 %v462
            %v621 = vpop.f32.mrb[0].mxu0
            %v622 = vadd.f32 0.0, %v621
            %v623 = vpop.f32.mrb[0].mxu0
            %624 = vmatprep.mubr.f32.mxu0 0.0
            %625 = vmatmul.mubr.f32.gmra.mrb[0].mxu0 %v463
            %v626 = vpop.f32.mrb[0].mxu0
            %v627 = vadd.f32 0.0, %v626
            %v628 = vpop.f32.mrb[0].mxu0
            %629 = vdwg.mxu0
            %v630 = vpack.c.bf16 %v557, %v552
            %v631 = vpack.c.bf16 %v567, %v562
            %v632 = vpack.c.bf16 %v577, %v572
            %v633 = vpack.c.bf16 %v587, %v582
            %v634 = vpack.c.bf16 %v597, %v592
            %v635 = vpack.c.bf16 %v607, %v602
            %v636 = vpack.c.bf16 %v617, %v612
            %v637 = vpack.c.bf16 %v627, %v622
            %s638 = sshra.s32 %s468, 4
            %s639 = sand.u32 %s468, 15
            %s640 = smul.addr %s638, 8
            %s641 = scalar_lea.vmem [#allocation3], %s640
            %642 = vst [vmem:[%s641] sm:$0xff] %v630
            %643 = vst [vmem:[%s641 + $0x8] sm:$0xff] %v631
            %644 = vst [vmem:[%s641 + $0x10] sm:$0xff] %v632
            %645 = vst [vmem:[%s641 + $0x18] sm:$0xff] %v633
            %646 = vst [vmem:[%s641 + $0x20] sm:$0xff] %v634
            %647 = vst [vmem:[%s641 + $0x28] sm:$0xff] %v635
            %648 = vst [vmem:[%s641 + $0x30] sm:$0xff] %v636
            %649 = vst [vmem:[%s641 + $0x38] sm:$0xff] %v637
          $region56: #{tpu_custom_call.1} parent=51 // pred_fallthru
            _
          %p650 = scmp.eq.s32.totalorder %s24, 2
          // Predicated region
          $region57: #{tpu_custom_call.1} parent=51 // pred_check
            %p651 = pneg %p650
          $region58: #{tpu_custom_call.1} parent=51 // pred_check_branch
            %653 = sbr.rel (%p651) target = $region60
          $region59: #{tpu_custom_call.1} parent=51 // pred_region
            %654 = vst [vmem:[#allocation10] sm:$0xff] %v448
            %655 = vst [vmem:[#allocation10 + $0x8] sm:$0xff] %v449
            %656 = vst [vmem:[#allocation10 + $0x10] sm:$0xff] %v450
            %657 = vst [vmem:[#allocation10 + $0x18] sm:$0xff] %v451
            %658 = vst [vmem:[#allocation10 + $0x20] sm:$0xff] %v452
            %659 = vst [vmem:[#allocation10 + $0x28] sm:$0xff] %v453
            %660 = vst [vmem:[#allocation10 + $0x30] sm:$0xff] %v454
            %661 = vst [vmem:[#allocation10 + $0x38] sm:$0xff] %v455
            %662 = vst [vmem:[#allocation10 + $0x40] sm:$0xff] %v456
            %663 = vst [vmem:[#allocation10 + $0x48] sm:$0xff] %v457
            %664 = vst [vmem:[#allocation10 + $0x50] sm:$0xff] %v458
            %665 = vst [vmem:[#allocation10 + $0x58] sm:$0xff] %v459
            %666 = vst [vmem:[#allocation10 + $0x60] sm:$0xff] %v460
            %667 = vst [vmem:[#allocation10 + $0x68] sm:$0xff] %v461
            %668 = vst [vmem:[#allocation10 + $0x70] sm:$0xff] %v462
            %669 = vst [vmem:[#allocation10 + $0x78] sm:$0xff] %v463
          $region60: #{tpu_custom_call.1} parent=51 // pred_fallthru
            _
        $region52: #{tpu_custom_call.1} parent=31 // pred_fallthru
          _
        %p670 = scmp.eq.s32.totalorder %s267, 1
        // Predicated region
        $region61: #{tpu_custom_call.1} parent=31 // pred_check
          %p671 = pneg %p670
        $region62: #{tpu_custom_call.1} parent=31 // pred_check_branch
          %673 = sbr.rel (%p671) target = $region64
        $region63: #{tpu_custom_call.1} parent=31 // pred_region
          %v674 = vld [vmem:[#allocation5] sm:$0xf]
          %v675 = vld [vmem:[#allocation5 + $0x4] sm:$0xf]
          %v676 = vld [vmem:[#allocation5 + $0x8] sm:$0xf]
          %v677 = vld [vmem:[#allocation5 + $0xc] sm:$0xf]
          %v678 = vld [vmem:[#allocation5 + $0x10] sm:$0xf]
          %v679 = vld [vmem:[#allocation5 + $0x14] sm:$0xf]
          %v680 = vld [vmem:[#allocation5 + $0x18] sm:$0xf]
          %v681 = vld [vmem:[#allocation5 + $0x1c] sm:$0xf]
          %v682 = vld [vmem:[#allocation5 + $0x20] sm:$0xf]
          %v683 = vld [vmem:[#allocation5 + $0x24] sm:$0xf]
          %v684 = vld [vmem:[#allocation5 + $0x28] sm:$0xf]
          %v685 = vld [vmem:[#allocation5 + $0x2c] sm:$0xf]
          %v686 = vld [vmem:[#allocation5 + $0x30] sm:$0xf]
          %v687 = vld [vmem:[#allocation5 + $0x34] sm:$0xf]
          %v688 = vld [vmem:[#allocation5 + $0x38] sm:$0xf]
          %v689 = vld [vmem:[#allocation5 + $0x3c] sm:$0xf]
          %v690 = vld [vmem:[#allocation3] sm:$0xff]
          %v691 = vld [vmem:[#allocation3 + $0x8] sm:$0xff]
          %v692 = vld [vmem:[#allocation3 + $0x10] sm:$0xff]
          %v693 = vld [vmem:[#allocation3 + $0x18] sm:$0xff]
          %v694 = vld [vmem:[#allocation3 + $0x20] sm:$0xff]
          %v695 = vld [vmem:[#allocation3 + $0x28] sm:$0xff]
          %v696 = vld [vmem:[#allocation3 + $0x30] sm:$0xff]
          %v697 = vld [vmem:[#allocation3 + $0x38] sm:$0xff]
          %v698 = vld [vmem:[%s232] sm:$0x1]
          %v700 = vlaneseq
          %v701 = vshrl.u32 %v700, 7
          %v702 = vsub.s32 0, %v701
          %v703 = vrot.slane %v698, %v702
          %v721 = vunpack.c.l.b16 %v674
          %v722 = vunpack.c.l.b16 %v675
          %v723 = vunpack.c.l.b16 %v676
          %v724 = vunpack.c.l.b16 %v677
          %v725 = vunpack.c.l.b16 %v678
          %v726 = vunpack.c.l.b16 %v679
          %v727 = vunpack.c.l.b16 %v680
          %v728 = vunpack.c.l.b16 %v681
          %v729 = vunpack.c.l.b16 %v682
          %v730 = vunpack.c.l.b16 %v683
          %v731 = vunpack.c.l.b16 %v684
          %v732 = vunpack.c.l.b16 %v685
          %v733 = vunpack.c.l.b16 %v686
          %v734 = vunpack.c.l.b16 %v687
          %v735 = vunpack.c.l.b16 %v688
          %v736 = vunpack.c.l.b16 %v689
          %v737 = vpack.c.b16 %v722, %v721
          %v738 = vpack.c.b16 %v724, %v723
          %v739 = vpack.c.b16 %v726, %v725
          %v740 = vpack.c.b16 %v728, %v727
          %v741 = vpack.c.b16 %v730, %v729
          %v742 = vpack.c.b16 %v732, %v731
          %v743 = vpack.c.b16 %v734, %v733
          %v744 = vpack.c.b16 %v736, %v735
          %753 = vmatprep.subr.bf16.mxu0 0
          %754 = vmatpush1.bf16.msra.mxu0 %v690
          %755 = vmatprep.subr.bf16.mxu0 0
          %756 = vmatpush1.bf16.msra.mxu0 %v691
          %757 = vmatprep.subr.bf16.mxu0 0
          %758 = vmatpush1.bf16.msra.mxu0 %v692
          %759 = vmatprep.subr.bf16.mxu0 0
          %760 = vmatpush1.bf16.msra.mxu0 %v693
          %761 = vmatprep.subr.bf16.mxu0 0
          %762 = vmatpush1.bf16.msra.mxu0 %v694
          %763 = vmatprep.subr.bf16.mxu0 0
          %764 = vmatpush1.bf16.msra.mxu0 %v695
          %765 = vmatprep.subr.bf16.mxu0 0
          %766 = vmatpush1.bf16.msra.mxu0 %v696
          %767 = vmatprep.subr.bf16.mxu0 0
          %768 = vmatpush1.bf16.msra.mxu0 %v697
          %769 = vmatprep.subr.bf16.mxu0 0
          %770 = vmatpush1.bf16.msra.mxu0 0
          %771 = vmatprep.subr.bf16.mxu0 0
          %772 = vmatpush1.bf16.msra.mxu0 0
          %773 = vmatprep.subr.bf16.mxu0 0
          %774 = vmatpush1.bf16.msra.mxu0 0
          %775 = vmatprep.subr.bf16.mxu0 0
          %776 = vmatpush1.bf16.msra.mxu0 0
          %777 = vmatprep.subr.bf16.mxu0 0
          %778 = vmatpush1.bf16.msra.mxu0 0
          %779 = vmatprep.subr.bf16.mxu0 0
          %780 = vmatpush1.bf16.msra.mxu0 0
          %781 = vmatprep.subr.bf16.mxu0 0
          %782 = vmatpush1.bf16.msra.mxu0 0
          %783 = vmatprep.subr.bf16.mxu0 0
          %784 = vmatpush1.bf16.msra.mxu0 0
          %785 = vmatprep.mubr.bf16.mxu0 0
          %786 = vmatmul.mubr.bf16.gmra.mrb[0].mxu0 %v737
          %v787 = vpop.f32.mrb[0].mxu0
          %v788 = vadd.f32 %v703, %v787
          %v789 = vpop.f32.mrb[0].mxu0
          %v790 = vpop.f32.mrb[0].mxu0
          %v791 = vadd.f32 %v703, %v790
          %v792 = vpop.f32.mrb[0].mxu0
          %793 = vmatprep.mubr.bf16.mxu0 0
          %794 = vmatmul.mubr.bf16.gmra.mrb[0].mxu0 %v738
          %v795 = vpop.f32.mrb[0].mxu0
          %v796 = vadd.f32 %v703, %v795
          %v797 = vpop.f32.mrb[0].mxu0
          %v798 = vpop.f32.mrb[0].mxu0
          %v799 = vadd.f32 %v703, %v798
          %v800 = vpop.f32.mrb[0].mxu0
          %801 = vmatprep.mubr.bf16.mxu0 0
          %802 = vmatmul.mubr.bf16.gmra.mrb[0].mxu0 %v739
          %v803 = vpop.f32.mrb[0].mxu0
          %v804 = vadd.f32 %v703, %v803
          %v805 = vpop.f32.mrb[0].mxu0
          %v806 = vpop.f32.mrb[0].mxu0
          %v807 = vadd.f32 %v703, %v806
          %v808 = vpop.f32.mrb[0].mxu0
          %809 = vmatprep.mubr.bf16.mxu0 0
          %810 = vmatmul.mubr.bf16.gmra.mrb[0].mxu0 %v740
          %v811 = vpop.f32.mrb[0].mxu0
          %v812 = vadd.f32 %v703, %v811
          %v813 = vpop.f32.mrb[0].mxu0
          %v814 = vpop.f32.mrb[0].mxu0
          %v815 = vadd.f32 %v703, %v814
          %v816 = vpop.f32.mrb[0].mxu0
          %817 = vmatprep.mubr.bf16.mxu0 0
          %818 = vmatmul.mubr.bf16.gmra.mrb[0].mxu0 %v741
          %v819 = vpop.f32.mrb[0].mxu0
          %v820 = vadd.f32 %v703, %v819
          %v821 = vpop.f32.mrb[0].mxu0
          %v822 = vpop.f32.mrb[0].mxu0
          %v823 = vadd.f32 %v703, %v822
          %v824 = vpop.f32.mrb[0].mxu0
          %825 = vmatprep.mubr.bf16.mxu0 0
          %826 = vmatmul.mubr.bf16.gmra.mrb[0].mxu0 %v742
          %v827 = vpop.f32.mrb[0].mxu0
          %v828 = vadd.f32 %v703, %v827
          %v829 = vpop.f32.mrb[0].mxu0
          %v830 = vpop.f32.mrb[0].mxu0
          %v831 = vadd.f32 %v703, %v830
          %v832 = vpop.f32.mrb[0].mxu0
          %833 = vmatprep.mubr.bf16.mxu0 0
          %834 = vmatmul.mubr.bf16.gmra.mrb[0].mxu0 %v743
          %v835 = vpop.f32.mrb[0].mxu0
          %v836 = vadd.f32 %v703, %v835
          %v837 = vpop.f32.mrb[0].mxu0
          %v838 = vpop.f32.mrb[0].mxu0
          %v839 = vadd.f32 %v703, %v838
          %v840 = vpop.f32.mrb[0].mxu0
          %841 = vmatprep.mubr.bf16.mxu0 0
          %842 = vmatmul.mubr.bf16.gmra.mrb[0].mxu0 %v744
          %v843 = vpop.f32.mrb[0].mxu0
          %v844 = vadd.f32 %v703, %v843
          %v845 = vpop.f32.mrb[0].mxu0
          %v846 = vpop.f32.mrb[0].mxu0
          %v847 = vadd.f32 %v703, %v846
          %v848 = vpop.f32.mrb[0].mxu0
          %849 = vdwg.mxu0
          %v850 = vmax.f32 %v788, 0.0
          %v851 = vmax.f32 %v791, 0.0
          %v852 = vmax.f32 %v796, 0.0
          %v853 = vmax.f32 %v799, 0.0
          %v854 = vmax.f32 %v804, 0.0
          %v855 = vmax.f32 %v807, 0.0
          %v856 = vmax.f32 %v812, 0.0
          %v857 = vmax.f32 %v815, 0.0
          %v858 = vmax.f32 %v820, 0.0
          %v859 = vmax.f32 %v823, 0.0
          %v860 = vmax.f32 %v828, 0.0
          %v861 = vmax.f32 %v831, 0.0
          %v862 = vmax.f32 %v836, 0.0
          %v863 = vmax.f32 %v839, 0.0
          %v864 = vmax.f32 %v844, 0.0
          %v865 = vmax.f32 %v847, 0.0
          %p866 = scmp.lt.s32.totalorder %s24, 2
          // Predicated region
          $region65: #{tpu_custom_call.1} parent=63 // pred_check
            %p867 = pneg %p866
          $region66: #{tpu_custom_call.1} parent=63 // pred_check_branch
            %869 = sbr.rel (%p867) target = $region68
          $region67: #{tpu_custom_call.1} parent=63 // pred_region
            %s870 = smul.u32 %s25, 128
            %v871 = vld [vmem:[%s208] sm:$0xff]
            %v872 = vld [vmem:[%s208 + $0x8] sm:$0xff]
            %v873 = vld [vmem:[%s208 + $0x10] sm:$0xff]
            %v874 = vld [vmem:[%s208 + $0x18] sm:$0xff]
            %v875 = vld [vmem:[%s208 + $0x20] sm:$0xff]
            %v876 = vld [vmem:[%s208 + $0x28] sm:$0xff]
            %v877 = vld [vmem:[%s208 + $0x30] sm:$0xff]
            %v878 = vld [vmem:[%s208 + $0x38] sm:$0xff]
            %v879 = vld [vmem:[%s208 + $0x40] sm:$0xff]
            %v880 = vld [vmem:[%s208 + $0x48] sm:$0xff]
            %v881 = vld [vmem:[%s208 + $0x50] sm:$0xff]
            %v882 = vld [vmem:[%s208 + $0x58] sm:$0xff]
            %v883 = vld [vmem:[%s208 + $0x60] sm:$0xff]
            %v884 = vld [vmem:[%s208 + $0x68] sm:$0xff]
            %v885 = vld [vmem:[%s208 + $0x70] sm:$0xff]
            %v886 = vld [vmem:[%s208 + $0x78] sm:$0xff]
            %887 = vmatprep.subr.mxu0 0.0
            %888 = vmatpush1.msra.mxu0 %v871
            %889 = vmatprep.subr.mxu0 0.0
            %890 = vmatpush1.msra.mxu0 %v872
            %891 = vmatprep.subr.mxu0 0.0
            %892 = vmatpush1.msra.mxu0 %v873
            %893 = vmatprep.subr.mxu0 0.0
            %894 = vmatpush1.msra.mxu0 %v874
            %895 = vmatprep.subr.mxu0 0.0
            %896 = vmatpush1.msra.mxu0 %v875
            %897 = vmatprep.subr.mxu0 0.0
            %898 = vmatpush1.msra.mxu0 %v876
            %899 = vmatprep.subr.mxu0 0.0
            %900 = vmatpush1.msra.mxu0 %v877
            %901 = vmatprep.subr.mxu0 0.0
            %902 = vmatpush1.msra.mxu0 %v878
            %903 = vmatprep.subr.mxu0 0.0
            %904 = vmatpush1.msra.mxu0 %v879
            %905 = vmatprep.subr.mxu0 0.0
            %906 = vmatpush1.msra.mxu0 %v880
            %907 = vmatprep.subr.mxu0 0.0
            %908 = vmatpush1.msra.mxu0 %v881
            %909 = vmatprep.subr.mxu0 0.0
            %910 = vmatpush1.msra.mxu0 %v882
            %911 = vmatprep.subr.mxu0 0.0
            %912 = vmatpush1.msra.mxu0 %v883
            %913 = vmatprep.subr.mxu0 0.0
            %914 = vmatpush1.msra.mxu0 %v884
            %915 = vmatprep.subr.mxu0 0.0
            %916 = vmatpush1.msra.mxu0 %v885
            %917 = vmatprep.subr.mxu0 0.0
            %918 = vmatpush1.msra.mxu0 %v886
            %919 = vmatprep.subr.mxu0 0.0
            %920 = vmatpush1.msra.mxu0 0.0
            %921 = vmatprep.subr.mxu0 0.0
            %922 = vmatpush1.msra.mxu0 0.0
            %923 = vmatprep.subr.mxu0 0.0
            %924 = vmatpush1.msra.mxu0 0.0
            %925 = vmatprep.subr.mxu0 0.0
            %926 = vmatpush1.msra.mxu0 0.0
            %927 = vmatprep.subr.mxu0 0.0
            %928 = vmatpush1.msra.mxu0 0.0
            %929 = vmatprep.subr.mxu0 0.0
            %930 = vmatpush1.msra.mxu0 0.0
            %931 = vmatprep.subr.mxu0 0.0
            %932 = vmatpush1.msra.mxu0 0.0
            %933 = vmatprep.subr.mxu0 0.0
            %934 = vmatpush1.msra.mxu0 0.0
            %935 = vmatprep.subr.mxu0 0.0
            %936 = vmatpush1.msra.mxu0 0.0
            %937 = vmatprep.subr.mxu0 0.0
            %938 = vmatpush1.msra.mxu0 0.0
            %939 = vmatprep.subr.mxu0 0.0
            %940 = vmatpush1.msra.mxu0 0.0
            %941 = vmatprep.subr.mxu0 0.0
            %942 = vmatpush1.msra.mxu0 0.0
            %943 = vmatprep.subr.mxu0 0.0
            %944 = vmatpush1.msra.mxu0 0.0
            %945 = vmatprep.subr.mxu0 0.0
            %946 = vmatpush1.msra.mxu0 0.0
            %947 = vmatprep.subr.mxu0 0.0
            %948 = vmatpush1.msra.mxu0 0.0
            %949 = vmatprep.subr.mxu0 0.0
            %950 = vmatpush1.msra.mxu0 0.0
            %951 = vmatprep.mubr.f32.mxu0 0.0
            %952 = vmatmul.mubr.f32.gmra.mrb[0].mxu0 %v850
            %v953 = vpop.f32.mrb[0].mxu0
            %v954 = vadd.f32 0.0, %v953
            %v955 = vpop.f32.mrb[0].mxu0
            %956 = vmatprep.mubr.f32.mxu0 0.0
            %957 = vmatmul.mubr.f32.gmra.mrb[0].mxu0 %v851
            %v958 = vpop.f32.mrb[0].mxu0
            %v959 = vadd.f32 0.0, %v958
            %v960 = vpop.f32.mrb[0].mxu0
            %961 = vmatprep.mubr.f32.mxu0 0.0
            %962 = vmatmul.mubr.f32.gmra.mrb[0].mxu0 %v852
            %v963 = vpop.f32.mrb[0].mxu0
            %v964 = vadd.f32 0.0, %v963
            %v965 = vpop.f32.mrb[0].mxu0
            %966 = vmatprep.mubr.f32.mxu0 0.0
            %967 = vmatmul.mubr.f32.gmra.mrb[0].mxu0 %v853
            %v968 = vpop.f32.mrb[0].mxu0
            %v969 = vadd.f32 0.0, %v968
            %v970 = vpop.f32.mrb[0].mxu0
            %971 = vmatprep.mubr.f32.mxu0 0.0
            %972 = vmatmul.mubr.f32.gmra.mrb[0].mxu0 %v854
            %v973 = vpop.f32.mrb[0].mxu0
            %v974 = vadd.f32 0.0, %v973
            %v975 = vpop.f32.mrb[0].mxu0
            %976 = vmatprep.mubr.f32.mxu0 0.0
            %977 = vmatmul.mubr.f32.gmra.mrb[0].mxu0 %v855
            %v978 = vpop.f32.mrb[0].mxu0
            %v979 = vadd.f32 0.0, %v978
            %v980 = vpop.f32.mrb[0].mxu0
            %981 = vmatprep.mubr.f32.mxu0 0.0
            %982 = vmatmul.mubr.f32.gmra.mrb[0].mxu0 %v856
            %v983 = vpop.f32.mrb[0].mxu0
            %v984 = vadd.f32 0.0, %v983
            %v985 = vpop.f32.mrb[0].mxu0
            %986 = vmatprep.mubr.f32.mxu0 0.0
            %987 = vmatmul.mubr.f32.gmra.mrb[0].mxu0 %v857
            %v988 = vpop.f32.mrb[0].mxu0
            %v989 = vadd.f32 0.0, %v988
            %v990 = vpop.f32.mrb[0].mxu0
            %991 = vmatprep.mubr.f32.mxu0 0.0
            %992 = vmatmul.mubr.f32.gmra.mrb[0].mxu0 %v858
            %v993 = vpop.f32.mrb[0].mxu0
            %v994 = vadd.f32 0.0, %v993
            %v995 = vpop.f32.mrb[0].mxu0
            %996 = vmatprep.mubr.f32.mxu0 0.0
            %997 = vmatmul.mubr.f32.gmra.mrb[0].mxu0 %v859
            %v998 = vpop.f32.mrb[0].mxu0
            %v999 = vadd.f32 0.0, %v998
            %v1000 = vpop.f32.mrb[0].mxu0
            %1001 = vmatprep.mubr.f32.mxu0 0.0
            %1002 = vmatmul.mubr.f32.gmra.mrb[0].mxu0 %v860
            %v1003 = vpop.f32.mrb[0].mxu0
            %v1004 = vadd.f32 0.0, %v1003
            %v1005 = vpop.f32.mrb[0].mxu0
            %1006 = vmatprep.mubr.f32.mxu0 0.0
            %1007 = vmatmul.mubr.f32.gmra.mrb[0].mxu0 %v861
            %v1008 = vpop.f32.mrb[0].mxu0
            %v1009 = vadd.f32 0.0, %v1008
            %v1010 = vpop.f32.mrb[0].mxu0
            %1011 = vmatprep.mubr.f32.mxu0 0.0
            %1012 = vmatmul.mubr.f32.gmra.mrb[0].mxu0 %v862
            %v1013 = vpop.f32.mrb[0].mxu0
            %v1014 = vadd.f32 0.0, %v1013
            %v1015 = vpop.f32.mrb[0].mxu0
            %1016 = vmatprep.mubr.f32.mxu0 0.0
            %1017 = vmatmul.mubr.f32.gmra.mrb[0].mxu0 %v863
            %v1018 = vpop.f32.mrb[0].mxu0
            %v1019 = vadd.f32 0.0, %v1018
            %v1020 = vpop.f32.mrb[0].mxu0
            %1021 = vmatprep.mubr.f32.mxu0 0.0
            %1022 = vmatmul.mubr.f32.gmra.mrb[0].mxu0 %v864
            %v1023 = vpop.f32.mrb[0].mxu0
            %v1024 = vadd.f32 0.0, %v1023
            %v1025 = vpop.f32.mrb[0].mxu0
            %1026 = vmatprep.mubr.f32.mxu0 0.0
            %1027 = vmatmul.mubr.f32.gmra.mrb[0].mxu0 %v865
            %v1028 = vpop.f32.mrb[0].mxu0
            %v1029 = vadd.f32 0.0, %v1028
            %v1030 = vpop.f32.mrb[0].mxu0
            %1031 = vdwg.mxu0
            %v1032 = vpack.c.bf16 %v959, %v954
            %v1033 = vpack.c.bf16 %v969, %v964
            %v1034 = vpack.c.bf16 %v979, %v974
            %v1035 = vpack.c.bf16 %v989, %v984
            %v1036 = vpack.c.bf16 %v999, %v994
            %v1037 = vpack.c.bf16 %v1009, %v1004
            %v1038 = vpack.c.bf16 %v1019, %v1014
            %v1039 = vpack.c.bf16 %v1029, %v1024
            %s1040 = sshra.s32 %s870, 4
            %s1041 = sand.u32 %s870, 15
            %s1042 = smul.addr %s1040, 8
            %s1043 = scalar_lea.vmem [#allocation2], %s1042
            %1044 = vst [vmem:[%s1043] sm:$0xff] %v1032
            %1045 = vst [vmem:[%s1043 + $0x8] sm:$0xff] %v1033
            %1046 = vst [vmem:[%s1043 + $0x10] sm:$0xff] %v1034
            %1047 = vst [vmem:[%s1043 + $0x18] sm:$0xff] %v1035
            %1048 = vst [vmem:[%s1043 + $0x20] sm:$0xff] %v1036
            %1049 = vst [vmem:[%s1043 + $0x28] sm:$0xff] %v1037
            %1050 = vst [vmem:[%s1043 + $0x30] sm:$0xff] %v1038
            %1051 = vst [vmem:[%s1043 + $0x38] sm:$0xff] %v1039
          $region68: #{tpu_custom_call.1} parent=63 // pred_fallthru
            _
          %p1052 = scmp.eq.s32.totalorder %s24, 2
          // Predicated region
          $region69: #{tpu_custom_call.1} parent=63 // pred_check
            %p1053 = pneg %p1052
          $region70: #{tpu_custom_call.1} parent=63 // pred_check_branch
            %1055 = sbr.rel (%p1053) target = $region72
          $region71: #{tpu_custom_call.1} parent=63 // pred_region
            %1056 = vst [vmem:[#allocation10] sm:$0xff] %v850
            %1057 = vst [vmem:[#allocation10 + $0x8] sm:$0xff] %v851
            %1058 = vst [vmem:[#allocation10 + $0x10] sm:$0xff] %v852
            %1059 = vst [vmem:[#allocation10 + $0x18] sm:$0xff] %v853
            %1060 = vst [vmem:[#allocation10 + $0x20] sm:$0xff] %v854
            %1061 = vst [vmem:[#allocation10 + $0x28] sm:$0xff] %v855
            %1062 = vst [vmem:[#allocation10 + $0x30] sm:$0xff] %v856
            %1063 = vst [vmem:[#allocation10 + $0x38] sm:$0xff] %v857
            %1064 = vst [vmem:[#allocation10 + $0x40] sm:$0xff] %v858
            %1065 = vst [vmem:[#allocation10 + $0x48] sm:$0xff] %v859
            %1066 = vst [vmem:[#allocation10 + $0x50] sm:$0xff] %v860
            %1067 = vst [vmem:[#allocation10 + $0x58] sm:$0xff] %v861
            %1068 = vst [vmem:[#allocation10 + $0x60] sm:$0xff] %v862
            %1069 = vst [vmem:[#allocation10 + $0x68] sm:$0xff] %v863
            %1070 = vst [vmem:[#allocation10 + $0x70] sm:$0xff] %v864
            %1071 = vst [vmem:[#allocation10 + $0x78] sm:$0xff] %v865
          $region72: #{tpu_custom_call.1} parent=63 // pred_fallthru
            _
        $region64: #{tpu_custom_call.1} parent=31 // pred_fallthru
          _
        // Predicated region
        $region73: #{tpu_custom_call.1} parent=31 // pred_check
          %p1072 = pneg %p128
        $region74: #{tpu_custom_call.1} parent=31 // pred_check_branch
          %1074 = sbr.rel (%p1072) target = $region76
        $region75: #{tpu_custom_call.1} parent=31 // pred_region
          %s1075 = smul.u32 16, %s25
          %s1077 = ssub.s32 2048, 2048
          %1078 = vsyncadd [#allocation7], %s1077
          %s1079 = smul.addr %s1075, 128
          %s1080 = scalar_lea.hbm %s4, %s1079
          %s1081 = sshll.u32 [#allocation10], 4
          %s1082 = int_to_ptr.vmem [resolvable:$true] %s1081
          %1087 = dma.vmem_to_hbm [thread:$0]  %s1082, 2048, %s1080, [#allocation7], 128, 128, 8
        $region76: #{tpu_custom_call.1} parent=31 // pred_fallthru
          _
        // Predicated region
        $region77: #{tpu_custom_call.1} parent=31 // pred_check
          %p1088 = pneg %p128
        $region78: #{tpu_custom_call.1} parent=31 // pred_check_branch
          %1090 = sbr.rel (%p1088) target = $region80
        $region79: #{tpu_custom_call.1} parent=31 // pred_region
          %1091 = dma.done [#allocation7], 2048
        $region80: #{tpu_custom_call.1} parent=31 // pred_fallthru
          _
      $region32: #{tpu_custom_call.1} parent=5 // pred_fallthru
        _
      %p1092 = scmp.le.s32.totalorder 2, %s15
      // Predicated region
      $region81: #{tpu_custom_call.1} parent=5 // pred_check
        %p1093 = pneg %p1092
      $region82: #{tpu_custom_call.1} parent=5 // pred_check_branch
        %1095 = sbr.rel (%p1093) target = $region84
      $region83: #{tpu_custom_call.1} parent=5 // pred_region
        %s1096 = ssub.s32 %s15, 2
      $region84: #{tpu_custom_call.1} parent=5 // pred_fallthru
        _
    $region6: #{tpu_custom_call.1} parent=1 // loop_footer
      %s19 = sadd.s32 1, %s15
    $region7: #{tpu_custom_call.1} parent=1 // loop_footer_branch
      %14 = sbr.rel target = $region3
    $region8: #{tpu_custom_call.1} parent=1 // loop_exit
      _
    %1097 = vsyncpa [#allocation6], 1
    %s1098 = scalar_lea.sflag [#allocation6], 1
    %1099 = vsyncpa %s1098, 1
    %1100 = vsyncpa [#allocation9], 1
    %s1101 = scalar_lea.sflag [#allocation9], 1
    %1102 = vsyncpa %s1101, 1
    %1103 = vsyncpa [#allocation7], 1
    %s1104 = scalar_lea.sflag [#allocation7], 1
    %1105 = vsyncpa %s1104, 1
  %1106 = vsyncmov [#allocation4]
  %s1107 = vpop.sfrf %1106
  %p1108 = scmp.eq.s32.totalorder %s1107, 0
  %p1109 = pneg %p1108
  %1111 = shalt.err (%p1109)

</llo_original>
